<compile_context>
chip_gen: v7x
topology: tpu7x:2x2x1
jax: 0.10.0
libtpu: 0.0.40
codegen_flags: <defaults>
</compile_context>

<pallas_src>
import functools
import math

import jax
import jax.numpy as jnp
from jax.experimental import pallas as pl
from jax.experimental.pallas import tpu as pltpu

_NEG_HALF_LOG_2PI = -0.5 * math.log(2.0 * math.pi)  # the "cte" constant


# ----------------------------- prior ----------------------------------------


class IsotropicGaussPrior:
    """Standard Bayes-By-Backprop isotropic Gaussian prior."""

    def __init__(self, mu=0.0, sigma=0.1):
        self.mu = float(mu)
        self.sigma = float(sigma)


# ----------------------------- helpers ---------------------------------------


def _softplus(x):
    # torch.nn.functional.softplus(x, beta=1, threshold=20)
    return jnp.where(x > 20.0, x, jnp.log1p(jnp.exp(x)))


def _pick_tile(dim, cap):
    """Largest multiple of 128 dividing `dim` that is <= cap, else the full dim."""
    if dim <= cap:
        return dim
    t = (cap // 128) * 128
    while t >= 128:
        if dim % t == 0:
            return t
        t -= 128
    return dim


# ----------------------------- Pallas kernels --------------------------------


def _bbb_sample_kernel(prior_mu, tile_lqw_const, lpw_scale, tile_lpw_const, x_resident,
                       x_ref, wmu_ref, wp_ref, bmu_ref, bp_ref, epsw_ref, epsb_ref,
                       out_ref, lqw_ref, lpw_ref,
                       slog_sc, seps_sc, sw2_sc):
    """Sampled path.  grid = (N tiles, K tiles); K (reduction) is the last axis.

    out block (B, TN) f32 is resident across K and doubles as the matmul accumulator.
    lqw/lpw are per-N-tile outputs; scratch partial sums are re-initialised at k==0
    of every N tile, so nothing is carried across N and the N axis can be "parallel".
    """
    k = pl.program_id(1)
    last_k = pl.num_programs(1) - 1

    @pl.when(k == 0)
    def _():
        # Sampled bias initialises the output accumulator; its log-like partials
        # seed the scratch accumulators (no separate zeroing pass needed).
        std_b = 1e-6 + _softplus(bp_ref[...])
        eps_b = epsb_ref[...]
        b = bmu_ref[...] + std_b * eps_b
        out_ref[...] = jnp.broadcast_to(b, out_ref.shape)
        slog_sc[...] = jnp.sum(jnp.log(std_b), axis=(0, 1), keepdims=True)
        seps_sc[...] = jnp.sum(eps_b * eps_b, axis=(0, 1), keepdims=True)
        db = b if prior_mu == 0.0 else b - prior_mu
        sw2_sc[...] = jnp.sum(db * db, axis=(0, 1), keepdims=True)

    # ---- one (TK, TN) weight tile ------------------------------------------
    eps_w = epsw_ref[...].astype(jnp.float32)          # bf16 -> f32 upcast in VMEM
    std_w = 1e-6 + _softplus(wp_ref[...])
    w = wmu_ref[...] + std_w * eps_w
    x = x_ref[k] if x_resident else x_ref[...]          # resident X: pick the k-slab
    out_ref[...] += jnp.dot(x, w, preferred_element_type=jnp.float32)

    # Hot loop keeps only three plain sums; signs / -0.5 / constants fold in at flush.
    slog_sc[...] += jnp.sum(jnp.log(std_w), axis=(0, 1), keepdims=True)
    seps_sc[...] += jnp.sum(eps_w * eps_w, axis=(0, 1), keepdims=True)
    d = w if prior_mu == 0.0 else w - prior_mu
    sw2_sc[...] += jnp.sum(d * d, axis=(0, 1), keepdims=True)

    @pl.when(k == last_k)
    def _():
        lqw_ref[...] = (tile_lqw_const - slog_sc[...]
                        - 0.5 * seps_sc[...]).reshape(lqw_ref.shape)
        lpw_ref[...] = (tile_lpw_const
                        + lpw_scale * sw2_sc[...]).reshape(lpw_ref.shape)


def _bbb_eval_kernel(x_resident, x_ref, wmu_ref, bmu_ref, out_ref):
    """Deterministic path: out = X @ W_mu + b_mu, tiled over (N, K)."""
    k = pl.program_id(1)

    @pl.when(k == 0)
    def _():
        out_ref[...] = jnp.broadcast_to(bmu_ref[...], out_ref.shape)

    x = x_ref[k] if x_resident else x_ref[...]
    out_ref[...] += jnp.dot(x, wmu_ref[...], preferred_element_type=jnp.float32)


# ----------------------------- module wrapper --------------------------------


class BayesLinearNormalq:
    """JAX / Pallas port of BayesLinear_Normalq (forward pass only)."""

    # Keep X fully VMEM-resident (single DMA) up to this many bytes.
    _X_RESIDENT_BYTES = 8 << 20

    def __init__(self, n_in, n_out, prior, key, tile_k=None, tile_n=None,
                 eps_dtype=jnp.bfloat16):
        self.n_in = int(n_in)
        self.n_out = int(n_out)
        self.prior = prior
        self.eps_dtype = eps_dtype
        k1, k2, k3, k4 = jax.random.split(key, 4)
        # synthetic init matching the torch __init__ ranges; biases kept [1, n_out]
        self.W_mu = jax.random.uniform(k1, (n_in, n_out), jnp.float32, -0.01, 0.01)
        self.W_p = jax.random.uniform(k2, (n_in, n_out), jnp.float32, -4.0, -3.0)
        self.b_mu = jax.random.uniform(k3, (1, n_out), jnp.float32, -0.01, 0.01)
        self.b_p = jax.random.uniform(k4, (1, n_out), jnp.float32, -4.0, -3.0)
        self.training = True
        # Default tile caps TK<=512, TN<=1024: double-buffered weight-shaped streams
        # (W_mu + W_p f32, eps_W bf16) ~= 10.5 MiB, safe on every generation (incl.
        # v7x's 64 MiB physical VMEM).
        self.tile_k = int(tile_k) if tile_k else _pick_tile(self.n_in, 512)
        self.tile_n = int(tile_n) if tile_n else _pick_tile(self.n_out, 1024)
        assert self.n_in % self.tile_k == 0 and self.n_out % self.tile_n == 0

    # -- shared pieces ---------------------------------------------------------

    def _grid(self):
        return (self.n_out // self.tile_n, self.n_in // self.tile_k)

    def _x_resident(self, B):
        return B * self.n_in * 4 <= self._X_RESIDENT_BYTES

    def _x_spec_and_arg(self, X):
        """Resident X (single DMA, k-slab picked in-kernel) when small; else blocked."""
        B = X.shape[0]
        tk = self.tile_k
        num_k = self.n_in // tk
        if self._x_resident(B):
            x3 = jnp.swapaxes(X.reshape(B, num_k, tk), 0, 1)      # (num_k, B, tk)
            return True, pl.BlockSpec((num_k, B, tk), lambda n, k: (0, 0, 0)), x3
        return False, pl.BlockSpec((B, tk), lambda n, k: (0, k)), X

    def _tile_loglike_consts(self):
        # Constants are per N tile (tiles are summed outside the kernel).
        cnt = self.tile_n * self.n_in + self.tile_n            # weights + bias per tile
        tile_lqw_const = cnt * _NEG_HALF_LOG_2PI
        lpw_scale = -0.5 / (self.prior.sigma ** 2)
        tile_lpw_const = cnt * (_NEG_HALF_LOG_2PI - math.log(self.prior.sigma))
        return tile_lqw_const, lpw_scale, tile_lpw_const

    def _vmem_limit_bytes(self, B, sampled, x_resident):
        """Working-set estimate + headroom, clamped to stay inside v7x's 64 MiB."""
        f32 = 4
        per_tile = self.tile_k * self.tile_n
        if sampled:
            eps_b = jnp.dtype(self.eps_dtype).itemsize
            w = 2 * per_tile * (2 * f32 + eps_b)                 # W_mu, W_p, eps_W (x2 buf)
        else:
            w = 2 * per_tile * f32                               # W_mu only
        x = (B * self.n_in * f32) if x_resident else (2 * B * self.tile_k * f32)
        out = 2 * B * self.tile_n * f32
        bias = 2 * 4 * self.tile_n * f32
        est = w + x + out + bias + (1 << 20)
        return int(min(max(est + (8 << 20), 32 << 20), 48 << 20))

    # -- eval path -------------------------------------------------------------

    def _forward_eval(self, X):
        B = X.shape[0]
        tk, tn = self.tile_k, self.tile_n
        x_res, x_spec, x_arg = self._x_spec_and_arg(X)
        out = pl.pallas_call(
            functools.partial(_bbb_eval_kernel, x_res),
            out_shape=jax.ShapeDtypeStruct((B, self.n_out), jnp.float32),
            grid=self._grid(),
            in_specs=[
                x_spec,                                         # X
                pl.BlockSpec((tk, tn), lambda n, k: (k, n)),    # W_mu
                pl.BlockSpec((1, tn), lambda n, k: (0, n)),     # b_mu
            ],
            out_specs=pl.BlockSpec((B, tn), lambda n, k: (0, n)),
            compiler_params=pltpu.CompilerParams(
                dimension_semantics=("parallel", "arbitrary"),
                vmem_limit_bytes=self._vmem_limit_bytes(B, False, x_res)),
        )(x_arg, self.W_mu, self.b_mu)
        return out, 0.0, 0.0

    # -- sampled path (host-supplied eps; eps_W in bf16) -------------------------

    def _forward_sample(self, X, key):
        B = X.shape[0]
        tk, tn = self.tile_k, self.tile_n
        num_n, num_k = self._grid()
        ke_w, ke_b = jax.random.split(key)
        eps_W = jax.random.normal(ke_w, (self.n_in, self.n_out),
                                  jnp.float32).astype(self.eps_dtype)
        eps_b = jax.random.normal(ke_b, (1, self.n_out), jnp.float32)

        x_res, x_spec, x_arg = self._x_spec_and_arg(X)
        kernel = functools.partial(
            _bbb_sample_kernel, self.prior.mu, *self._tile_loglike_consts(), x_res)

        out, lqw_parts, lpw_parts = pl.pallas_call(
            kernel,
            out_shape=(jax.ShapeDtypeStruct((B, self.n_out), jnp.float32),
                       jax.ShapeDtypeStruct((num_n, 1, 1), jnp.float32),
                       jax.ShapeDtypeStruct((num_n, 1, 1), jnp.float32)),
            grid=(num_n, num_k),
            in_specs=[
                x_spec,                                         # X
                pl.BlockSpec((tk, tn), lambda n, k: (k, n)),    # W_mu
                pl.BlockSpec((tk, tn), lambda n, k: (k, n)),    # W_p
                pl.BlockSpec((1, tn), lambda n, k: (0, n)),     # b_mu
                pl.BlockSpec((1, tn), lambda n, k: (0, n)),     # b_p
                pl.BlockSpec((tk, tn), lambda n, k: (k, n)),    # eps_W (bf16)
                pl.BlockSpec((1, tn), lambda n, k: (0, n)),     # eps_b
            ],
            out_specs=(
                pl.BlockSpec((B, tn), lambda n, k: (0, n)),     # output (acc across K)
                pl.BlockSpec((1, 1, 1), lambda n, k: (n, 0, 0)),  # lqw per-N-tile partials
                pl.BlockSpec((1, 1, 1), lambda n, k: (n, 0, 0)),  # lpw per-N-tile partials
            ),
            scratch_shapes=[pltpu.VMEM((1, 1), jnp.float32),    # sum log(std)
                            pltpu.VMEM((1, 1), jnp.float32),    # sum eps^2
                            pltpu.VMEM((1, 1), jnp.float32)],   # sum (w - mu_p)^2
            compiler_params=pltpu.CompilerParams(
                # Nothing is carried across N tiles anymore, so N is "parallel"
                # (v7x megacore shards it); K (reduction) stays "arbitrary" and last.
                dimension_semantics=("parallel", "arbitrary"),
                vmem_limit_bytes=self._vmem_limit_bytes(B, True, x_res)),
        )(x_arg, self.W_mu, self.W_p, self.b_mu, self.b_p, eps_W, eps_b)
        return out, jnp.sum(lqw_parts), jnp.sum(lpw_parts)

    # -- public forward ----------------------------------------------------------

    def forward(self, X, key=None, sample=False):
        if (not self.training) and (not sample):
            return self._forward_eval(X)
        assert key is not None, "sampling path needs a PRNG key"
        return self._forward_sample(X, key)


# ----------------------------- pure-JAX reference ----------------------------


def _reference_sample(layer, X, eps_W, eps_b):
    std_w = 1e-6 + jax.nn.softplus(layer.W_p)
    std_b = 1e-6 + jax.nn.softplus(layer.b_p)
    W = layer.W_mu + std_w * eps_W
    b = layer.b_mu + std_b * eps_b
    out = jnp.dot(X, W, precision=jax.lax.Precision.HIGHEST) + b

    def ll(x, mu, sigma):
        return jnp.sum(-0.5 * math.log(2.0 * math.pi) - jnp.log(sigma)
                       - 0.5 * ((x - mu) / sigma) ** 2)

    lqw = ll(W, layer.W_mu, std_w) + ll(b, layer.b_mu, std_b)
    lpw = (ll(W, layer.prior.mu, jnp.float32(layer.prior.sigma))
           + ll(b, layer.prior.mu, jnp.float32(layer.prior.sigma)))
    return out, lqw, lpw


# ----------------------------- main -------------------------------------------


if __name__ == "__main__":
    key = jax.random.PRNGKey(0)
    k_param, k_x, k_eps = jax.random.split(key, 3)

    B, N_IN, N_OUT = 8, 256, 512
    # Small explicit tiles so the demo exercises a real (2, 2) grid: K accumulation,
    # bias init at k==0, per-N-tile lqw/lpw flush at k==last_k, resident-X k-slabs.
    layer = BayesLinearNormalq(N_IN, N_OUT, IsotropicGaussPrior(0.0, 0.1),
                               k_param, tile_k=128, tile_n=256)
    X = jax.random.normal(k_x, (B, N_IN), jnp.float32)

    # ---- sampled (training) path: exact check against same-eps reference --------
    out, lqw, lpw = layer.forward(X, key=k_eps, sample=True)
    out = jax.block_until_ready(out)
    lqw = float(lqw)
    lpw = float(lpw)

    ke_w, ke_b = jax.random.split(k_eps)            # same split as the kernel wrapper
    eps_W = (jax.random.normal(ke_w, (N_IN, N_OUT), jnp.float32)
             .astype(layer.eps_dtype).astype(jnp.float32))       # same bf16-quantized eps
    eps_b = jax.random.normal(ke_b, (1, N_OUT), jnp.float32)
    ref_out, ref_lqw, ref_lpw = _reference_sample(layer, X, eps_W, eps_b)
    ref_lqw = float(ref_lqw)
    ref_lpw = float(ref_lpw)

    assert jnp.allclose(out, ref_out, atol=5e-3, rtol=1e-2), "sampled output mismatch"
    assert abs(lqw - ref_lqw) <= 5e-4 * abs(ref_lqw) + 1.0, "lqw mismatch"
    assert abs(lpw - ref_lpw) <= 5e-4 * abs(ref_lpw) + 1.0, "lpw mismatch"

    # ---- deterministic eval path -------------------------------------------------
    layer.training = False
    out_eval, z0, z1 = layer.forward(X, sample=False)
    out_eval = jax.block_until_ready(out_eval)
    ref_eval = jnp.dot(X, layer.W_mu, precision=jax.lax.Precision.HIGHEST) + layer.b_mu
    assert jnp.allclose(out_eval, ref_eval, atol=5e-3, rtol=1e-2), "eval output mismatch"
    assert z0 == 0.0 and z1 == 0.0

    print("KERNEL_OK")
</pallas_src>

<mosaic_0001>
module attributes {stable_mosaic.version = 11 : i64} {
  func.func @_bbb_sample_kernel(%arg0: i32, %arg1: i32, %arg2: memref<2x8x128xf32, #tpu.memory_space<vmem>>, %arg3: memref<128x256xf32, #tpu.memory_space<vmem>>, %arg4: memref<128x256xf32, #tpu.memory_space<vmem>>, %arg5: memref<1x256xf32, #tpu.memory_space<vmem>>, %arg6: memref<1x256xf32, #tpu.memory_space<vmem>>, %arg7: memref<128x256xbf16, #tpu.memory_space<vmem>>, %arg8: memref<1x256xf32, #tpu.memory_space<vmem>>, %arg9: memref<8x256xf32, #tpu.memory_space<vmem>>, %arg10: memref<1x1x1xf32, #tpu.memory_space<vmem>>, %arg11: memref<1x1x1xf32, #tpu.memory_space<vmem>>, %arg12: memref<1x1xf32, #tpu.memory_space<vmem>>, %arg13: memref<1x1xf32, #tpu.memory_space<vmem>>, %arg14: memref<1x1xf32, #tpu.memory_space<vmem>>) attributes {dimension_semantics = [#tpu.dimension_semantics<parallel>, #tpu.dimension_semantics<arbitrary>], iteration_bounds = array<i64: 2, 2>, scalar_prefetch = 0 : i64, scratch_operands = 3 : i64, tpu.core_type = #tpu.core_type<tc>, window_params = [{pipeline_mode = #tpu.pipeline_mode<synchronous>, transform_indices = @transform_0, window_bounds = array<i64: 2, 8, 128>}, {transform_indices = @transform_1, window_bounds = array<i64: 128, 256>}, {transform_indices = @transform_2, window_bounds = array<i64: 128, 256>}, {transform_indices = @transform_3, window_bounds = array<i64: 1, 256>}, {transform_indices = @transform_4, window_bounds = array<i64: 1, 256>}, {transform_indices = @transform_5, window_bounds = array<i64: 128, 256>}, {transform_indices = @transform_6, window_bounds = array<i64: 1, 256>}, {transform_indices = @transform_7, window_bounds = array<i64: 8, 256>}, {transform_indices = @transform_8, window_bounds = array<i64: 1, 1, 1>}, {transform_indices = @transform_9, window_bounds = array<i64: 1, 1, 1>}]} {
    %c0_i32 = arith.constant 0 : i32
    %0 = arith.cmpi eq, %arg1, %c0_i32 : i32
    %1 = arith.extui %0 : i1 to i32
    %c0_i32_0 = arith.constant 0 : i32
    %2 = arith.cmpi ne, %1, %c0_i32_0 : i32
    scf.if %2 {
      %c0_30 = arith.constant 0 : index
      %c0_31 = arith.constant 0 : index
      %53 = vector.load %arg6[%c0_30, %c0_31] : memref<1x256xf32, #tpu.memory_space<vmem>>, vector<1x256xf32>
      %cst_32 = arith.constant 2.000000e+01 : f32
      %54 = vector.broadcast %cst_32 : f32 to vector<1x256xf32>
      %55 = arith.cmpf ogt, %53, %54 : vector<1x256xf32>
      %56 = math.exp %53 : vector<1x256xf32>
      %57 = math.log1p %56 : vector<1x256xf32>
      %58 = arith.select %55, %53, %57 : vector<1x256xi1>, vector<1x256xf32>
      %cst_33 = arith.constant 9.99999997E-7 : f32
      %59 = vector.broadcast %cst_33 : f32 to vector<1x256xf32>
      %60 = arith.addf %59, %58 : vector<1x256xf32>
      %c0_34 = arith.constant 0 : index
      %c0_35 = arith.constant 0 : index
      %61 = vector.load %arg8[%c0_34, %c0_35] : memref<1x256xf32, #tpu.memory_space<vmem>>, vector<1x256xf32>
      %c0_36 = arith.constant 0 : index
      %c0_37 = arith.constant 0 : index
      %62 = vector.load %arg5[%c0_36, %c0_37] : memref<1x256xf32, #tpu.memory_space<vmem>>, vector<1x256xf32>
      %63 = arith.mulf %60, %61 : vector<1x256xf32>
      %64 = arith.addf %62, %63 : vector<1x256xf32>
      %65 = vector.shape_cast %64 : vector<1x256xf32> to vector<1x256xf32>
      %66 = vector.broadcast %65 : vector<1x256xf32> to vector<8x256xf32>
      %c0_38 = arith.constant 0 : index
      %c0_39 = arith.constant 0 : index
      %67 = vector.load %arg9[%c0_38, %c0_39] : memref<8x256xf32, #tpu.memory_space<vmem>>, vector<8x256xf32>
      tpu.vector_store %arg9[%c0_38, %c0_39], %66 {strides = array<i32>} : memref<8x256xf32, #tpu.memory_space<vmem>>, vector<8x256xf32>,
      %68 = math.log %60 : vector<1x256xf32>
      %69 = vector.shape_cast %68 : vector<1x256xf32> to vector<1x1x256xf32>
      %cst_40 = arith.constant dense<0.000000e+00> : vector<1xf32>
      %70 = vector.multi_reduction <add>, %69, %cst_40 [1, 2] : vector<1x1x256xf32> to vector<1xf32>
      %71 = vector.shape_cast %70 : vector<1xf32> to vector<1x1x1xf32>
      %72 = vector.extract %71[0, 0, 0] : f32 from vector<1x1x1xf32>
      %73 = vector.broadcast %72 : f32 to vector<1x1xf32>
      %c0_41 = arith.constant 0 : index
      %c0_42 = arith.constant 0 : index
      %74 = vector.load %arg12[%c0_41, %c0_42] : memref<1x1xf32, #tpu.memory_space<vmem>>, vector<1x1xf32>
      tpu.vector_store %arg12[%c0_41, %c0_42], %73 {strides = array<i32>} : memref<1x1xf32, #tpu.memory_space<vmem>>, vector<1x1xf32>,
      %75 = arith.mulf %61, %61 : vector<1x256xf32>
      %76 = vector.shape_cast %75 : vector<1x256xf32> to vector<1x1x256xf32>
      %cst_43 = arith.constant dense<0.000000e+00> : vector<1xf32>
      %77 = vector.multi_reduction <add>, %76, %cst_43 [1, 2] : vector<1x1x256xf32> to vector<1xf32>
      %78 = vector.shape_cast %77 : vector<1xf32> to vector<1x1x1xf32>
      %79 = vector.extract %78[0, 0, 0] : f32 from vector<1x1x1xf32>
      %80 = vector.broadcast %79 : f32 to vector<1x1xf32>
      %c0_44 = arith.constant 0 : index
      %c0_45 = arith.constant 0 : index
      %81 = vector.load %arg13[%c0_44, %c0_45] : memref<1x1xf32, #tpu.memory_space<vmem>>, vector<1x1xf32>
      tpu.vector_store %arg13[%c0_44, %c0_45], %80 {strides = array<i32>} : memref<1x1xf32, #tpu.memory_space<vmem>>, vector<1x1xf32>,
      %82 = arith.mulf %64, %64 : vector<1x256xf32>
      %83 = vector.shape_cast %82 : vector<1x256xf32> to vector<1x1x256xf32>
      %cst_46 = arith.constant dense<0.000000e+00> : vector<1xf32>
      %84 = vector.multi_reduction <add>, %83, %cst_46 [1, 2] : vector<1x1x256xf32> to vector<1xf32>
      %85 = vector.shape_cast %84 : vector<1xf32> to vector<1x1x1xf32>
      %86 = vector.extract %85[0, 0, 0] : f32 from vector<1x1x1xf32>
      %87 = vector.broadcast %86 : f32 to vector<1x1xf32>
      %c0_47 = arith.constant 0 : index
      %c0_48 = arith.constant 0 : index
      %88 = vector.load %arg14[%c0_47, %c0_48] : memref<1x1xf32, #tpu.memory_space<vmem>>, vector<1x1xf32>
      tpu.vector_store %arg14[%c0_47, %c0_48], %87 {strides = array<i32>} : memref<1x1xf32, #tpu.memory_space<vmem>>, vector<1x1xf32>,
    } else {
    }
    %c0 = arith.constant 0 : index
    %c0_1 = arith.constant 0 : index
    %3 = vector.load %arg7[%c0, %c0_1] : memref<128x256xbf16, #tpu.memory_space<vmem>>, vector<128x256xbf16>
    %4 = arith.extf %3 : vector<128x256xbf16> to vector<128x256xf32>
    %c0_2 = arith.constant 0 : index
    %c0_3 = arith.constant 0 : index
    %5 = vector.load %arg4[%c0_2, %c0_3] : memref<128x256xf32, #tpu.memory_space<vmem>>, vector<128x256xf32>
    %cst = arith.constant 2.000000e+01 : f32
    %6 = vector.broadcast %cst : f32 to vector<128x256xf32>
    %7 = arith.cmpf ogt, %5, %6 : vector<128x256xf32>
    %8 = math.exp %5 : vector<128x256xf32>
    %9 = math.log1p %8 : vector<128x256xf32>
    %10 = arith.select %7, %5, %9 : vector<128x256xi1>, vector<128x256xf32>
    %cst_4 = arith.constant 9.99999997E-7 : f32
    %11 = vector.broadcast %cst_4 : f32 to vector<128x256xf32>
    %12 = arith.addf %11, %10 : vector<128x256xf32>
    %c0_5 = arith.constant 0 : index
    %c0_6 = arith.constant 0 : index
    %13 = vector.load %arg3[%c0_5, %c0_6] : memref<128x256xf32, #tpu.memory_space<vmem>>, vector<128x256xf32>
    %14 = arith.mulf %12, %4 : vector<128x256xf32>
    %15 = arith.addf %13, %14 : vector<128x256xf32>
    %16 = arith.index_cast %arg1 : i32 to index
    %c0_7 = arith.constant 0 : index
    %c0_8 = arith.constant 0 : index
    %17 = vector.load %arg2[%16, %c0_7, %c0_8] : memref<2x8x128xf32, #tpu.memory_space<vmem>>, vector<1x8x128xf32>
    %18 = vector.shape_cast %17 : vector<1x8x128xf32> to vector<8x128xf32>
    %c0_9 = arith.constant 0 : index
    %c0_10 = arith.constant 0 : index
    %19 = vector.load %arg9[%c0_9, %c0_10] : memref<8x256xf32, #tpu.memory_space<vmem>>, vector<8x256xf32>
    %cst_11 = arith.constant dense<0.000000e+00> : vector<8x256xf32>
    %20 = tpu.matmul %18, %15, %cst_11 {dimension_numbers = #tpu.dot_dimension_numbers<[1], [0], [0], [1], [0, 0, 1, 1], [], []>} : vector<8x128xf32>, vector<128x256xf32>, vector<8x256xf32> -> vector<8x256xf32>
    %21 = arith.addf %19, %20 : vector<8x256xf32>
    %c0_12 = arith.constant 0 : index
    %c0_13 = arith.constant 0 : index
    %22 = vector.load %arg9[%c0_12, %c0_13] : memref<8x256xf32, #tpu.memory_space<vmem>>, vector<8x256xf32>
    tpu.vector_store %arg9[%c0_12, %c0_13], %21 {strides = array<i32>} : memref<8x256xf32, #tpu.memory_space<vmem>>, vector<8x256xf32>,
    %c0_14 = arith.constant 0 : index
    %c0_15 = arith.constant 0 : index
    %23 = vector.load %arg12[%c0_14, %c0_15] : memref<1x1xf32, #tpu.memory_space<vmem>>, vector<1x1xf32>
    %24 = math.log %12 : vector<128x256xf32>
    %25 = vector.shape_cast %24 : vector<128x256xf32> to vector<1x128x256xf32>
    %cst_16 = arith.constant dense<0.000000e+00> : vector<1xf32>
    %26 = vector.multi_reduction <add>, %25, %cst_16 [1, 2] : vector<1x128x256xf32> to vector<1xf32>
    %27 = vector.shape_cast %26 : vector<1xf32> to vector<1x1x1xf32>
    %28 = vector.extract %27[0, 0, 0] : f32 from vector<1x1x1xf32>
    %29 = vector.broadcast %28 : f32 to vector<1x1xf32>
    %30 = arith.addf %23, %29 : vector<1x1xf32>
    %c0_17 = arith.constant 0 : index
    %c0_18 = arith.constant 0 : index
    %31 = vector.load %arg12[%c0_17, %c0_18] : memref<1x1xf32, #tpu.memory_space<vmem>>, vector<1x1xf32>
    tpu.vector_store %arg12[%c0_17, %c0_18], %30 {strides = array<i32>} : memref<1x1xf32, #tpu.memory_space<vmem>>, vector<1x1xf32>,
    %c0_19 = arith.constant 0 : index
    %c0_20 = arith.constant 0 : index
    %32 = vector.load %arg13[%c0_19, %c0_20] : memref<1x1xf32, #tpu.memory_space<vmem>>, vector<1x1xf32>
    %33 = arith.mulf %4, %4 : vector<128x256xf32>
    %34 = vector.shape_cast %33 : vector<128x256xf32> to vector<1x128x256xf32>
    %cst_21 = arith.constant dense<0.000000e+00> : vector<1xf32>
    %35 = vector.multi_reduction <add>, %34, %cst_21 [1, 2] : vector<1x128x256xf32> to vector<1xf32>
    %36 = vector.shape_cast %35 : vector<1xf32> to vector<1x1x1xf32>
    %37 = vector.extract %36[0, 0, 0] : f32 from vector<1x1x1xf32>
    %38 = vector.broadcast %37 : f32 to vector<1x1xf32>
    %39 = arith.addf %32, %38 : vector<1x1xf32>
    %c0_22 = arith.constant 0 : index
    %c0_23 = arith.constant 0 : index
    %40 = vector.load %arg13[%c0_22, %c0_23] : memref<1x1xf32, #tpu.memory_space<vmem>>, vector<1x1xf32>
    tpu.vector_store %arg13[%c0_22, %c0_23], %39 {strides = array<i32>} : memref<1x1xf32, #tpu.memory_space<vmem>>, vector<1x1xf32>,
    %c0_24 = arith.constant 0 : index
    %c0_25 = arith.constant 0 : index
    %41 = vector.load %arg14[%c0_24, %c0_25] : memref<1x1xf32, #tpu.memory_space<vmem>>, vector<1x1xf32>
    %42 = arith.mulf %15, %15 : vector<128x256xf32>
    %43 = vector.shape_cast %42 : vector<128x256xf32> to vector<1x128x256xf32>
    %cst_26 = arith.constant dense<0.000000e+00> : vector<1xf32>
    %44 = vector.multi_reduction <add>, %43, %cst_26 [1, 2] : vector<1x128x256xf32> to vector<1xf32>
    %45 = vector.shape_cast %44 : vector<1xf32> to vector<1x1x1xf32>
    %46 = vector.extract %45[0, 0, 0] : f32 from vector<1x1x1xf32>
    %47 = vector.broadcast %46 : f32 to vector<1x1xf32>
    %48 = arith.addf %41, %47 : vector<1x1xf32>
    %c0_27 = arith.constant 0 : index
    %c0_28 = arith.constant 0 : index
    %49 = vector.load %arg14[%c0_27, %c0_28] : memref<1x1xf32, #tpu.memory_space<vmem>>, vector<1x1xf32>
    tpu.vector_store %arg14[%c0_27, %c0_28], %48 {strides = array<i32>} : memref<1x1xf32, #tpu.memory_space<vmem>>, vector<1x1xf32>,
    %c1_i32 = arith.constant 1 : i32
    %50 = arith.cmpi eq, %arg1, %c1_i32 : i32
    %51 = arith.extui %50 : i1 to i32
    %c0_i32_29 = arith.constant 0 : i32
    %52 = arith.cmpi ne, %51, %c0_i32_29 : i32
    scf.if %52 {
      %c0_30 = arith.constant 0 : index
      %c0_31 = arith.constant 0 : index
      %53 = vector.load %arg12[%c0_30, %c0_31] : memref<1x1xf32, #tpu.memory_space<vmem>>, vector<1x1xf32>
      %cst_32 = arith.constant -60458.8046 : f32
      %54 = vector.broadcast %cst_32 : f32 to vector<1x1xf32>
      %55 = arith.subf %54, %53 : vector<1x1xf32>
      %c0_33 = arith.constant 0 : index
      %c0_34 = arith.constant 0 : index
      %56 = vector.load %arg13[%c0_33, %c0_34] : memref<1x1xf32, #tpu.memory_space<vmem>>, vector<1x1xf32>
      %cst_35 = arith.constant 5.000000e-01 : f32
      %57 = vector.broadcast %cst_35 : f32 to vector<1x1xf32>
      %58 = arith.mulf %57, %56 : vector<1x1xf32>
      %59 = arith.subf %55, %58 : vector<1x1xf32>
      %60 = vector.shape_cast %59 : vector<1x1xf32> to vector<1x1x1xf32>
      %c0_36 = arith.constant 0 : index
      %c0_37 = arith.constant 0 : index
      %c0_38 = arith.constant 0 : index
      %61 = vector.load %arg10[%c0_36, %c0_37, %c0_38] : memref<1x1x1xf32, #tpu.memory_space<vmem>>, vector<1x1x1xf32>
      tpu.vector_store %arg10[%c0_36, %c0_37, %c0_38], %60 {strides = array<i32>} : memref<1x1x1xf32, #tpu.memory_space<vmem>>, vector<1x1x1xf32>,
      %c0_39 = arith.constant 0 : index
      %c0_40 = arith.constant 0 : index
      %62 = vector.load %arg14[%c0_39, %c0_40] : memref<1x1xf32, #tpu.memory_space<vmem>>, vector<1x1xf32>
      %cst_41 = arith.constant -5.000000e+01 : f32
      %63 = vector.broadcast %cst_41 : f32 to vector<1x1xf32>
      %64 = arith.mulf %63, %62 : vector<1x1xf32>
      %cst_42 = arith.constant 91032.875 : f32
      %65 = vector.broadcast %cst_42 : f32 to vector<1x1xf32>
      %66 = arith.addf %65, %64 : vector<1x1xf32>
      %67 = vector.shape_cast %66 : vector<1x1xf32> to vector<1x1x1xf32>
      %c0_43 = arith.constant 0 : index
      %c0_44 = arith.constant 0 : index
      %c0_45 = arith.constant 0 : index
      %68 = vector.load %arg11[%c0_43, %c0_44, %c0_45] : memref<1x1x1xf32, #tpu.memory_space<vmem>>, vector<1x1x1xf32>
      tpu.vector_store %arg11[%c0_43, %c0_44, %c0_45], %67 {strides = array<i32>} : memref<1x1x1xf32, #tpu.memory_space<vmem>>, vector<1x1x1xf32>,
    } else {
    }
    return
  }
  func.func @transform_0(%arg0: i32, %arg1: i32) -> (i32, i32, i32) {
    %c0_i32 = arith.constant 0 : i32
    %c0_i32_0 = arith.constant 0 : i32
    %c0_i32_1 = arith.constant 0 : i32
    %c0_i32_2 = arith.constant 0 : i32
    return %c0_i32, %c0_i32_0, %c0_i32_1 : i32, i32, i32
  }
  func.func @transform_1(%arg0: i32, %arg1: i32) -> (i32, i32) {
    %c0_i32 = arith.constant 0 : i32
    return %arg1, %arg0 : i32, i32
  }
  func.func @transform_2(%arg0: i32, %arg1: i32) -> (i32, i32) {
    %c0_i32 = arith.constant 0 : i32
    return %arg1, %arg0 : i32, i32
  }
  func.func @transform_3(%arg0: i32, %arg1: i32) -> (i32, i32) {
    %c0_i32 = arith.constant 0 : i32
    %c0_i32_0 = arith.constant 0 : i32
    return %c0_i32, %arg0 : i32, i32
  }
  func.func @transform_4(%arg0: i32, %arg1: i32) -> (i32, i32) {
    %c0_i32 = arith.constant 0 : i32
    %c0_i32_0 = arith.constant 0 : i32
    return %c0_i32, %arg0 : i32, i32
  }
  func.func @transform_5(%arg0: i32, %arg1: i32) -> (i32, i32) {
    %c0_i32 = arith.constant 0 : i32
    return %arg1, %arg0 : i32, i32
  }
  func.func @transform_6(%arg0: i32, %arg1: i32) -> (i32, i32) {
    %c0_i32 = arith.constant 0 : i32
    %c0_i32_0 = arith.constant 0 : i32
    return %c0_i32, %arg0 : i32, i32
  }
  func.func @transform_7(%arg0: i32, %arg1: i32) -> (i32, i32) {
    %c0_i32 = arith.constant 0 : i32
    %c0_i32_0 = arith.constant 0 : i32
    return %c0_i32, %arg0 : i32, i32
  }
  func.func @transform_8(%arg0: i32, %arg1: i32) -> (i32, i32, i32) {
    %c0_i32 = arith.constant 0 : i32
    %c0_i32_0 = arith.constant 0 : i32
    %c0_i32_1 = arith.constant 0 : i32
    return %arg0, %c0_i32, %c0_i32_0 : i32, i32, i32
  }
  func.func @transform_9(%arg0: i32, %arg1: i32) -> (i32, i32, i32) {
    %c0_i32 = arith.constant 0 : i32
    %c0_i32_0 = arith.constant 0 : i32
    %c0_i32_1 = arith.constant 0 : i32
    return %arg0, %c0_i32, %c0_i32_0 : i32, i32, i32
  }
}

</mosaic_0001>

<llo_original>
// kernel: tpu_custom_call.1
$region0: #{tpu_custom_call.1}
  #allocation0 [shape = 'u32[]', space=smem, size = 0x4, offset = 0x4, fixed_abs, tag = 'smem constant byte address 0x4 - core index']
  #allocation1 [shape = 'u32[144,128]{1,0:T(1,128)}', space=vmem, size = 0x12000, scoped, tag = 'internal scratch']
  #allocation2 [shape = 'f32[1,1]{1,0:T(1,128)}', space=vmem, size = 0x200, scoped, tag = 'scratch operand']
  #allocation3 [shape = 'f32[1,1]{1,0:T(1,128)}', space=vmem, size = 0x200, scoped, tag = 'scratch operand']
  #allocation4 [shape = 'f32[1,1]{1,0:T(1,128)}', space=vmem, size = 0x200, scoped, tag = 'scratch operand']
  %s0 = inlined_call_operand.hbm [shape: f32[2,8,128], index: 0, kind: input, shape index: {}]
  %s1 = inlined_call_operand.hbm [shape: f32[256,512], index: 1, kind: input, shape index: {}]
  %s2 = inlined_call_operand.hbm [shape: f32[256,512], index: 2, kind: input, shape index: {}]
  %s3 = inlined_call_operand.vmem [shape: f32[1,512], index: 3, kind: input, shape index: {}]
  %s4 = inlined_call_operand.vmem [shape: f32[1,512], index: 4, kind: input, shape index: {}]
  %s5 = inlined_call_operand.hbm [shape: bf16[256,512], index: 5, kind: input, shape index: {}]
  %s6 = inlined_call_operand.vmem [shape: f32[1,512], index: 6, kind: input, shape index: {}]
  %s7 = inlined_call_operand.hbm [shape: f32[8,512], index: 7, kind: output, shape index: {0}]
  %s8 = inlined_call_operand.vmem [shape: f32[2,1,1], index: 8, kind: output, shape index: {1}]
  %s9 = inlined_call_operand.vmem [shape: f32[2,1,1], index: 9, kind: output, shape index: {2}]
  %10 = xla_tuple %s7, %s8, %s9
  %s11 = sld [smem:[#allocation0]]
  $region101: #{tpu_custom_call.1} parent=0
    _
  %s13 = ssub.s32 1, %s11
  %s14 = scalar_select 0, %s13, %s11
  $region1: #{tpu_custom_call.1} parent=0
    #allocation5 [shape = 'u8[8192]{0}', space=vmem, size = 0x2000, scoped, tag = 'input window, operand 0, single buffered']
    #allocation6 [shape = 's32[2]{0}', space=sflag, size = 0x8, scoped, tag = 'scoped memory for tpu_custom_call.1']
    #allocation7 [shape = 's32[2]{0}', space=sflag, size = 0x8, scoped, tag = 'scoped memory for tpu_custom_call.1']
    #allocation8 [shape = 'u8[262144]{0}', space=vmem, size = 0x40000, scoped, tag = 'input window, operand 1']
    #allocation9 [shape = 's32[2]{0}', space=sflag, size = 0x8, scoped, tag = 'scoped memory for tpu_custom_call.1']
    #allocation10 [shape = 'u8[262144]{0}', space=vmem, size = 0x40000, scoped, tag = 'input window, operand 2']
    #allocation11 [shape = 'u8[131072]{0}', space=vmem, size = 0x20000, scoped, tag = 'input window, operand 5']
    #allocation12 [shape = 's32[2]{0}', space=sflag, size = 0x8, scoped, tag = 'scoped memory for tpu_custom_call.1']
    #allocation13 [shape = 'u8[16384]{0}', space=vmem, size = 0x4000, scoped, tag = 'output window, operand 0']
    %15 = vsyncpa [#allocation6], 0
    %16 = vsyncpa [#allocation9], 0
    %s17 = scalar_lea.sflag [#allocation9], 1
    %18 = vsyncpa %s17, 0
    %19 = vsyncpa [#allocation12], 0
    %s20 = scalar_lea.sflag [#allocation12], 1
    %21 = vsyncpa %s20, 0
    %22 = vsyncpa [#allocation7], 0
    %s23 = scalar_lea.sflag [#allocation7], 1
    %24 = vsyncpa %s23, 0
    loop: start=0, step=1, limit=6
    $region2: #{tpu_custom_call.1} parent=1 // loop_pre_header
      _
    $region3: #{tpu_custom_call.1} parent=1 // loop_header
      %s26 = sphi 0, %s30
      %p27 = scmp.ge.s32.totalorder %s26, 6
      %s33 = sphi 0, %s45
      %s34 = sphi 0, %s41
      %s35 = sphi 0, %s33
      %s36 = sphi 0, %s34
      %s37 = sphi 0, %s35
      %s38 = sphi 0, %s36
      %s46 = sphi 0, %s46
      %s48 = sphi 0, %s46
      %s49 = sphi 0, %s48
      %s63 = sphi 0, %s49
      %s71 = sphi 0, %s73
      %s74 = sphi 0, %s71
      %s75 = sphi 0, %s74
      %s91 = sphi 0, %s75
      %s99 = sphi 0, %s101
      %s102 = sphi 0, %s99
      %s103 = sphi 0, %s102
      %s119 = sphi 0, %s103
      %s125 = sphi 0, %s127
      %s128 = sphi 0, %s125
      %s129 = sphi 0, %s128
      %s145 = sphi 0, %s129
      %s151 = sphi 0, %s153
      %s154 = sphi 0, %s151
      %s155 = sphi 0, %s154
      %s171 = sphi 0, %s155
      %s179 = sphi 0, %s181
      %s182 = sphi 0, %s179
      %s183 = sphi 0, %s182
      %s199 = sphi 0, %s183
      %s205 = sphi 0, %s207
      %s208 = sphi 0, %s205
      %s209 = sphi 0, %s208
      %s225 = sphi 0, %s209
      %s231 = sphi 0, %s233
      %s234 = sphi 0, %s231
      %s235 = sphi 0, %s234
      %s251 = sphi 0, %s235
      %s257 = sphi 0, %s259
      %s260 = sphi 0, %s257
      %s261 = sphi 0, %s260
      %s277 = sphi 0, %s261
      %s283 = sphi 0, %s285
      %s286 = sphi 0, %s283
      %s287 = sphi 0, %s286
      %s303 = sphi 0, %s287
    $region4: #{tpu_custom_call.1} parent=1 // loop_header_branch
      %29 = sbr.rel (%p27) target = $region8
    $region5: #{tpu_custom_call.1} parent=1 // loop_body
      %s31 = ssub.s32 %s26, 1
      %s32 = ssub.s32 %s26, 2
      %s39 = sadd.s32 1, %s34
      %p40 = scmp.ge.s32.totalorder %s39, 2
      %s41 = scalar_select %p40, 0, %s39
      %s42 = sadd.s32 1, %s33
      %s43 = scalar_select %p40, %s42, %s33
      %p44 = scmp.ge.s32.totalorder %s43, 2
      %s45 = scalar_select %p44, 0, %s43
      %s47 = sadd.s32 %s46, 1
      %p50 = scmp.eq.s32.totalorder %s26, 3
      %p51 = scmp.ne.s32.totalorder %s46, %s48
      %p52 = scmp.eq.s32.totalorder %s26, 0
      %p53 = por %p51, %p52
      %p54 = scmp.ne.s32.totalorder %s46, %s48
      %p55 = scmp.eq.s32.totalorder %s31, 3
      %p56 = por %p54, %p55
      %p57 = scmp.ne.s32.totalorder %s48, %s49
      %p58 = scmp.eq.s32.totalorder %s31, 0
      %p59 = por %p57, %p58
      %p60 = scmp.ne.s32.totalorder %s48, %s49
      %p61 = scmp.eq.s32.totalorder %s32, 3
      %p62 = por %p60, %p61
      %p64 = scmp.ne.s32.totalorder %s49, %s63
      %p65 = scmp.eq.s32.totalorder %s32, 0
      %p66 = por %p64, %p65
      %s67 = ssub.s32 %s34, %s41
      %s68 = ssub.s32 %s33, %s45
      %s69 = sor.u32 %s67, %s68
      %p70 = scmp.eq.s32.totalorder %s69, 0
      %s72 = sadd.s32 %s71, 1
      %s73 = scalar_select %p70, %s71, %s72
      %p76 = pneg %p70
      %p77 = scmp.eq.s32.totalorder %s26, 3
      %p78 = por %p76, %p77
      %p79 = scmp.ne.s32.totalorder %s71, %s74
      %p80 = scmp.eq.s32.totalorder %s26, 0
      %p81 = por %p79, %p80
      %p82 = scmp.ne.s32.totalorder %s71, %s74
      %p83 = scmp.eq.s32.totalorder %s31, 3
      %p84 = por %p82, %p83
      %p85 = scmp.ne.s32.totalorder %s74, %s75
      %p86 = scmp.eq.s32.totalorder %s31, 0
      %p87 = por %p85, %p86
      %p88 = scmp.ne.s32.totalorder %s74, %s75
      %p89 = scmp.eq.s32.totalorder %s32, 3
      %p90 = por %p88, %p89
      %p92 = scmp.ne.s32.totalorder %s75, %s91
      %p93 = scmp.eq.s32.totalorder %s32, 0
      %p94 = por %p92, %p93
      %s95 = ssub.s32 %s34, %s41
      %s96 = ssub.s32 %s33, %s45
      %s97 = sor.u32 %s95, %s96
      %p98 = scmp.eq.s32.totalorder %s97, 0
      %s100 = sadd.s32 %s99, 1
      %s101 = scalar_select %p98, %s99, %s100
      %p104 = pneg %p98
      %p105 = scmp.eq.s32.totalorder %s26, 3
      %p106 = por %p104, %p105
      %p107 = scmp.ne.s32.totalorder %s99, %s102
      %p108 = scmp.eq.s32.totalorder %s26, 0
      %p109 = por %p107, %p108
      %p110 = scmp.ne.s32.totalorder %s99, %s102
      %p111 = scmp.eq.s32.totalorder %s31, 3
      %p112 = por %p110, %p111
      %p113 = scmp.ne.s32.totalorder %s102, %s103
      %p114 = scmp.eq.s32.totalorder %s31, 0
      %p115 = por %p113, %p114
      %p116 = scmp.ne.s32.totalorder %s102, %s103
      %p117 = scmp.eq.s32.totalorder %s32, 3
      %p118 = por %p116, %p117
      %p120 = scmp.ne.s32.totalorder %s103, %s119
      %p121 = scmp.eq.s32.totalorder %s32, 0
      %p122 = por %p120, %p121
      %s123 = ssub.s32 %s33, %s45
      %p124 = scmp.eq.s32.totalorder %s123, 0
      %s126 = sadd.s32 %s125, 1
      %s127 = scalar_select %p124, %s125, %s126
      %p130 = pneg %p124
      %p131 = scmp.eq.s32.totalorder %s26, 3
      %p132 = por %p130, %p131
      %p133 = scmp.ne.s32.totalorder %s125, %s128
      %p134 = scmp.eq.s32.totalorder %s26, 0
      %p135 = por %p133, %p134
      %p136 = scmp.ne.s32.totalorder %s125, %s128
      %p137 = scmp.eq.s32.totalorder %s31, 3
      %p138 = por %p136, %p137
      %p139 = scmp.ne.s32.totalorder %s128, %s129
      %p140 = scmp.eq.s32.totalorder %s31, 0
      %p141 = por %p139, %p140
      %p142 = scmp.ne.s32.totalorder %s128, %s129
      %p143 = scmp.eq.s32.totalorder %s32, 3
      %p144 = por %p142, %p143
      %p146 = scmp.ne.s32.totalorder %s129, %s145
      %p147 = scmp.eq.s32.totalorder %s32, 0
      %p148 = por %p146, %p147
      %s149 = ssub.s32 %s33, %s45
      %p150 = scmp.eq.s32.totalorder %s149, 0
      %s152 = sadd.s32 %s151, 1
      %s153 = scalar_select %p150, %s151, %s152
      %p156 = pneg %p150
      %p157 = scmp.eq.s32.totalorder %s26, 3
      %p158 = por %p156, %p157
      %p159 = scmp.ne.s32.totalorder %s151, %s154
      %p160 = scmp.eq.s32.totalorder %s26, 0
      %p161 = por %p159, %p160
      %p162 = scmp.ne.s32.totalorder %s151, %s154
      %p163 = scmp.eq.s32.totalorder %s31, 3
      %p164 = por %p162, %p163
      %p165 = scmp.ne.s32.totalorder %s154, %s155
      %p166 = scmp.eq.s32.totalorder %s31, 0
      %p167 = por %p165, %p166
      %p168 = scmp.ne.s32.totalorder %s154, %s155
      %p169 = scmp.eq.s32.totalorder %s32, 3
      %p170 = por %p168, %p169
      %p172 = scmp.ne.s32.totalorder %s155, %s171
      %p173 = scmp.eq.s32.totalorder %s32, 0
      %p174 = por %p172, %p173
      %s175 = ssub.s32 %s34, %s41
      %s176 = ssub.s32 %s33, %s45
      %s177 = sor.u32 %s175, %s176
      %p178 = scmp.eq.s32.totalorder %s177, 0
      %s180 = sadd.s32 %s179, 1
      %s181 = scalar_select %p178, %s179, %s180
      %p184 = pneg %p178
      %p185 = scmp.eq.s32.totalorder %s26, 3
      %p186 = por %p184, %p185
      %p187 = scmp.ne.s32.totalorder %s179, %s182
      %p188 = scmp.eq.s32.totalorder %s26, 0
      %p189 = por %p187, %p188
      %p190 = scmp.ne.s32.totalorder %s179, %s182
      %p191 = scmp.eq.s32.totalorder %s31, 3
      %p192 = por %p190, %p191
      %p193 = scmp.ne.s32.totalorder %s182, %s183
      %p194 = scmp.eq.s32.totalorder %s31, 0
      %p195 = por %p193, %p194
      %p196 = scmp.ne.s32.totalorder %s182, %s183
      %p197 = scmp.eq.s32.totalorder %s32, 3
      %p198 = por %p196, %p197
      %p200 = scmp.ne.s32.totalorder %s183, %s199
      %p201 = scmp.eq.s32.totalorder %s32, 0
      %p202 = por %p200, %p201
      %s203 = ssub.s32 %s33, %s45
      %p204 = scmp.eq.s32.totalorder %s203, 0
      %s206 = sadd.s32 %s205, 1
      %s207 = scalar_select %p204, %s205, %s206
      %p210 = pneg %p204
      %p211 = scmp.eq.s32.totalorder %s26, 3
      %p212 = por %p210, %p211
      %p213 = scmp.ne.s32.totalorder %s205, %s208
      %p214 = scmp.eq.s32.totalorder %s26, 0
      %p215 = por %p213, %p214
      %p216 = scmp.ne.s32.totalorder %s205, %s208
      %p217 = scmp.eq.s32.totalorder %s31, 3
      %p218 = por %p216, %p217
      %p219 = scmp.ne.s32.totalorder %s208, %s209
      %p220 = scmp.eq.s32.totalorder %s31, 0
      %p221 = por %p219, %p220
      %p222 = scmp.ne.s32.totalorder %s208, %s209
      %p223 = scmp.eq.s32.totalorder %s32, 3
      %p224 = por %p222, %p223
      %p226 = scmp.ne.s32.totalorder %s209, %s225
      %p227 = scmp.eq.s32.totalorder %s32, 0
      %p228 = por %p226, %p227
      %s229 = ssub.s32 %s33, %s45
      %p230 = scmp.eq.s32.totalorder %s229, 0
      %s232 = sadd.s32 %s231, 1
      %s233 = scalar_select %p230, %s231, %s232
      %p236 = pneg %p230
      %p237 = scmp.eq.s32.totalorder %s26, 3
      %p238 = por %p236, %p237
      %p239 = scmp.ne.s32.totalorder %s231, %s234
      %p240 = scmp.eq.s32.totalorder %s26, 0
      %p241 = por %p239, %p240
      %p242 = scmp.ne.s32.totalorder %s231, %s234
      %p243 = scmp.eq.s32.totalorder %s31, 3
      %p244 = por %p242, %p243
      %p245 = scmp.ne.s32.totalorder %s234, %s235
      %p246 = scmp.eq.s32.totalorder %s31, 0
      %p247 = por %p245, %p246
      %p248 = scmp.ne.s32.totalorder %s234, %s235
      %p249 = scmp.eq.s32.totalorder %s32, 3
      %p250 = por %p248, %p249
      %p252 = scmp.ne.s32.totalorder %s235, %s251
      %p253 = scmp.eq.s32.totalorder %s32, 0
      %p254 = por %p252, %p253
      %s255 = ssub.s32 %s33, %s45
      %p256 = scmp.eq.s32.totalorder %s255, 0
      %s258 = sadd.s32 %s257, 1
      %s259 = scalar_select %p256, %s257, %s258
      %p262 = pneg %p256
      %p263 = scmp.eq.s32.totalorder %s26, 3
      %p264 = por %p262, %p263
      %p265 = scmp.ne.s32.totalorder %s257, %s260
      %p266 = scmp.eq.s32.totalorder %s26, 0
      %p267 = por %p265, %p266
      %p268 = scmp.ne.s32.totalorder %s257, %s260
      %p269 = scmp.eq.s32.totalorder %s31, 3
      %p270 = por %p268, %p269
      %p271 = scmp.ne.s32.totalorder %s260, %s261
      %p272 = scmp.eq.s32.totalorder %s31, 0
      %p273 = por %p271, %p272
      %p274 = scmp.ne.s32.totalorder %s260, %s261
      %p275 = scmp.eq.s32.totalorder %s32, 3
      %p276 = por %p274, %p275
      %p278 = scmp.ne.s32.totalorder %s261, %s277
      %p279 = scmp.eq.s32.totalorder %s32, 0
      %p280 = por %p278, %p279
      %s281 = ssub.s32 %s33, %s45
      %p282 = scmp.eq.s32.totalorder %s281, 0
      %s284 = sadd.s32 %s283, 1
      %s285 = scalar_select %p282, %s283, %s284
      %p288 = pneg %p282
      %p289 = scmp.eq.s32.totalorder %s26, 3
      %p290 = por %p288, %p289
      %p291 = scmp.ne.s32.totalorder %s283, %s286
      %p292 = scmp.eq.s32.totalorder %s26, 0
      %p293 = por %p291, %p292
      %p294 = scmp.ne.s32.totalorder %s283, %s286
      %p295 = scmp.eq.s32.totalorder %s31, 3
      %p296 = por %p294, %p295
      %p297 = scmp.ne.s32.totalorder %s286, %s287
      %p298 = scmp.eq.s32.totalorder %s31, 0
      %p299 = por %p297, %p298
      %p300 = scmp.ne.s32.totalorder %s286, %s287
      %p301 = scmp.eq.s32.totalorder %s32, 3
      %p302 = por %p300, %p301
      %p304 = scmp.ne.s32.totalorder %s287, %s303
      %p305 = scmp.eq.s32.totalorder %s32, 0
      %p306 = por %p304, %p305
      %p307 = scmp.le.s32.totalorder 1, %s26
      %p308 = scmp.lt.s32.totalorder %s26, 5
      %p309 = pnand %p307, %p308
      %p310 = pneg %p309
      // Predicated region
      $region9: #{tpu_custom_call.1} parent=5 // pred_check
        _
      $region10: #{tpu_custom_call.1} parent=5 // pred_check_branch
        %312 = sbr.rel (%p309) target = $region12
      $region11: #{tpu_custom_call.1} parent=5 // pred_region
        %s313 = ssub.s32 %s26, 1
        // Predicated region
        $region13: #{tpu_custom_call.1} parent=11 // pred_check
          %p314 = pneg %p59
        $region14: #{tpu_custom_call.1} parent=11 // pred_check_branch
          %316 = sbr.rel (%p314) target = $region16
        $region15: #{tpu_custom_call.1} parent=11 // pred_region
          %s318 = ssub.s32 256, 256
          %319 = vsyncadd [#allocation6], %s318
          %s320 = sshll.u32 [#allocation5], 4
          %s321 = int_to_ptr.vmem [resolvable:$true] %s320
          %326 = dma.hbm_to_vmem [thread:$0]  %s0, 256, %s321, [#allocation6], 128, 128, 8
        $region16: #{tpu_custom_call.1} parent=11 // pred_fallthru
          _
      $region12: #{tpu_custom_call.1} parent=5 // pred_fallthru
        _
      %p327 = scmp.lt.s32.totalorder %s26, 4
      // Predicated region
      $region17: #{tpu_custom_call.1} parent=5 // pred_check
        %p328 = pneg %p327
      $region18: #{tpu_custom_call.1} parent=5 // pred_check_branch
        %330 = sbr.rel (%p328) target = $region20
      $region19: #{tpu_custom_call.1} parent=5 // pred_region
        // Predicated region
        $region21: #{tpu_custom_call.1} parent=19 // pred_check
          %p331 = pneg %p81
        $region22: #{tpu_custom_call.1} parent=19 // pred_check_branch
          %333 = sbr.rel (%p331) target = $region24
        $region23: #{tpu_custom_call.1} parent=19 // pred_region
          %s334 = sand.u32 %s26, 1
          %s335 = scalar_lea.sflag [#allocation9], %s334
          %s336 = sand.u32 %s71, 1
          %s337 = smul.addr %s336, 256
          %s338 = scalar_lea.vmem [#allocation8], %s337
          %s339 = smul.u32 16, %s34
          %s340 = smul.u32 2, %s33
          %s342 = ssub.s32 4096, 4096
          %343 = vsyncadd %s335, %s342
          %s344 = smul.addr %s339, 4
          %s345 = sadd.s32 %s340, %s344
          %s346 = smul.addr %s345, 128
          %s347 = scalar_lea.hbm %s1, %s346
          %s348 = sshll.u32 %s338, 4
          %s349 = int_to_ptr.vmem [resolvable:$true] %s348
          %354 = dma.hbm_to_vmem [thread:$0]  %s347, 4096, %s349, %s335, 512, 256, 16
        $region24: #{tpu_custom_call.1} parent=19 // pred_fallthru
          _
        // Predicated region
        $region25: #{tpu_custom_call.1} parent=19 // pred_check
          %p355 = pneg %p109
        $region26: #{tpu_custom_call.1} parent=19 // pred_check_branch
          %357 = sbr.rel (%p355) target = $region28
        $region27: #{tpu_custom_call.1} parent=19 // pred_region
          %s358 = sand.u32 %s26, 1
          %s359 = scalar_lea.sflag [#allocation9], %s358
          %s360 = sand.u32 %s99, 1
          %s361 = smul.addr %s360, 256
          %s362 = scalar_lea.vmem [#allocation10], %s361
          %s363 = smul.u32 16, %s34
          %s364 = smul.u32 2, %s33
          %s366 = ssub.s32 4096, 4096
          %367 = vsyncadd %s359, %s366
          %s368 = smul.addr %s363, 4
          %s369 = sadd.s32 %s364, %s368
          %s370 = smul.addr %s369, 128
          %s371 = scalar_lea.hbm %s2, %s370
          %s372 = sshll.u32 %s362, 4
          %s373 = int_to_ptr.vmem [resolvable:$true] %s372
          %378 = dma.hbm_to_vmem [thread:$0]  %s371, 4096, %s373, %s359, 512, 256, 16
        $region28: #{tpu_custom_call.1} parent=19 // pred_fallthru
          _
        // Predicated region
        $region29: #{tpu_custom_call.1} parent=19 // pred_check
          %p379 = pneg %p135
        $region30: #{tpu_custom_call.1} parent=19 // pred_check_branch
          %381 = sbr.rel (%p379) target = $region32
        $region31: #{tpu_custom_call.1} parent=19 // pred_region
          %s382 = smul.u32 2, %s33
          %p383 = scmp.lt.s32.totalorder %s382, 3
          %s384 = scalar_select %p383, %s382, 3
          %s385 = scalar_lea.vmem %s3, %s384
          %s386 = smul.u32 2, %s33
        $region32: #{tpu_custom_call.1} parent=19 // pred_fallthru
          _
        // Predicated region
        $region33: #{tpu_custom_call.1} parent=19 // pred_check
          %p387 = pneg %p161
        $region34: #{tpu_custom_call.1} parent=19 // pred_check_branch
          %389 = sbr.rel (%p387) target = $region36
        $region35: #{tpu_custom_call.1} parent=19 // pred_region
          %s390 = smul.u32 2, %s33
          %p391 = scmp.lt.s32.totalorder %s390, 3
          %s392 = scalar_select %p391, %s390, 3
          %s393 = scalar_lea.vmem %s4, %s392
          %s394 = smul.u32 2, %s33
        $region36: #{tpu_custom_call.1} parent=19 // pred_fallthru
          _
        // Predicated region
        $region37: #{tpu_custom_call.1} parent=19 // pred_check
          %p395 = pneg %p189
        $region38: #{tpu_custom_call.1} parent=19 // pred_check_branch
          %397 = sbr.rel (%p395) target = $region40
        $region39: #{tpu_custom_call.1} parent=19 // pred_region
          %s398 = sand.u32 %s179, 1
          %s399 = scalar_lea.sflag [#allocation12], %s398
          %s400 = sand.u32 %s179, 1
          %s401 = smul.addr %s400, 128
          %s402 = scalar_lea.vmem [#allocation11], %s401
          %s403 = smul.u32 16, %s34
          %s404 = smul.u32 2, %s33
          %s406 = ssub.s32 2048, 2048
          %407 = vsyncadd %s399, %s406
          %s408 = smul.addr %s403, 4
          %s409 = sadd.s32 %s404, %s408
          %s410 = smul.addr %s409, 64
          %s411 = scalar_lea.hbm %s5, %s410
          %s412 = sshll.u32 %s402, 4
          %s413 = int_to_ptr.vmem [resolvable:$true] %s412
          %418 = dma.hbm_to_vmem [thread:$0]  %s411, 2048, %s413, %s399, 256, 128, 8
        $region40: #{tpu_custom_call.1} parent=19 // pred_fallthru
          _
        // Predicated region
        $region41: #{tpu_custom_call.1} parent=19 // pred_check
          %p419 = pneg %p215
        $region42: #{tpu_custom_call.1} parent=19 // pred_check_branch
          %421 = sbr.rel (%p419) target = $region44
        $region43: #{tpu_custom_call.1} parent=19 // pred_region
          %s422 = smul.u32 2, %s33
          %p423 = scmp.lt.s32.totalorder %s422, 3
          %s424 = scalar_select %p423, %s422, 3
          %s425 = scalar_lea.vmem %s6, %s424
          %s426 = smul.u32 2, %s33
        $region44: #{tpu_custom_call.1} parent=19 // pred_fallthru
          _
      $region20: #{tpu_custom_call.1} parent=5 // pred_fallthru
        _
      %p427 = scmp.le.s32.totalorder 1, %s26
      %p428 = scmp.lt.s32.totalorder %s26, 5
      %p429 = pnand %p427, %p428
      %p430 = pneg %p429
      // Predicated region
      $region45: #{tpu_custom_call.1} parent=5 // pred_check
        _
      $region46: #{tpu_custom_call.1} parent=5 // pred_check_branch
        %432 = sbr.rel (%p429) target = $region48
      $region47: #{tpu_custom_call.1} parent=5 // pred_region
        %s433 = ssub.s32 %s26, 1
        // Predicated region
        $region49: #{tpu_custom_call.1} parent=47 // pred_check
          %p434 = pneg %p59
        $region50: #{tpu_custom_call.1} parent=47 // pred_check_branch
          %436 = sbr.rel (%p434) target = $region52
        $region51: #{tpu_custom_call.1} parent=47 // pred_region
          %437 = dma.done [#allocation6], 256
        $region52: #{tpu_custom_call.1} parent=47 // pred_fallthru
          _
        %s438 = sand.u32 %s31, 1
        %s439 = scalar_lea.sflag [#allocation9], %s438
        %s440 = sand.u32 %s74, 1
        %s441 = smul.addr %s440, 256
        %s442 = scalar_lea.vmem [#allocation8], %s441
        // Predicated region
        $region53: #{tpu_custom_call.1} parent=47 // pred_check
          %p443 = pneg %p87
        $region54: #{tpu_custom_call.1} parent=47 // pred_check_branch
          %445 = sbr.rel (%p443) target = $region56
        $region55: #{tpu_custom_call.1} parent=47 // pred_region
          %446 = dma.done %s439, 4096
        $region56: #{tpu_custom_call.1} parent=47 // pred_fallthru
          _
        %s447 = sand.u32 %s31, 1
        %s448 = scalar_lea.sflag [#allocation9], %s447
        %s449 = sand.u32 %s102, 1
        %s450 = smul.addr %s449, 256
        %s451 = scalar_lea.vmem [#allocation10], %s450
        // Predicated region
        $region57: #{tpu_custom_call.1} parent=47 // pred_check
          %p452 = pneg %p115
        $region58: #{tpu_custom_call.1} parent=47 // pred_check_branch
          %454 = sbr.rel (%p452) target = $region60
        $region59: #{tpu_custom_call.1} parent=47 // pred_region
          %455 = dma.done %s448, 4096
        $region60: #{tpu_custom_call.1} parent=47 // pred_fallthru
          _
        %s456 = sand.u32 %s182, 1
        %s457 = scalar_lea.sflag [#allocation12], %s456
        %s458 = sand.u32 %s182, 1
        %s459 = smul.addr %s458, 128
        %s460 = scalar_lea.vmem [#allocation11], %s459
        // Predicated region
        $region61: #{tpu_custom_call.1} parent=47 // pred_check
          %p461 = pneg %p195
        $region62: #{tpu_custom_call.1} parent=47 // pred_check_branch
          %463 = sbr.rel (%p461) target = $region64
        $region63: #{tpu_custom_call.1} parent=47 // pred_region
          %464 = dma.done %s457, 2048
        $region64: #{tpu_custom_call.1} parent=47 // pred_fallthru
          _
        %p465 = pneg %p59
        %p466 = pneg %p56
        %s467 = sand.u32 %s31, 1
        %s468 = scalar_lea.sflag [#allocation9], %s467
        %s469 = sand.u32 %s74, 1
        %s470 = smul.addr %s469, 256
        %s471 = scalar_lea.vmem [#allocation8], %s470
        %p472 = pneg %p87
        %p473 = pneg %p84
        %s474 = sand.u32 %s31, 1
        %s475 = scalar_lea.sflag [#allocation9], %s474
        %s476 = sand.u32 %s102, 1
        %s477 = smul.addr %s476, 256
        %s478 = scalar_lea.vmem [#allocation10], %s477
        %p479 = pneg %p115
        %p480 = pneg %p112
        %s481 = smul.u32 2, %s35
        %p482 = scmp.lt.s32.totalorder %s481, 3
        %s483 = scalar_select %p482, %s481, 3
        %s484 = scalar_lea.vmem %s3, %s483
        %p485 = pneg %p141
        %p486 = pneg %p138
        %s487 = smul.u32 2, %s35
        %p488 = scmp.lt.s32.totalorder %s487, 3
        %s489 = scalar_select %p488, %s487, 3
        %s490 = scalar_lea.vmem %s4, %s489
        %p491 = pneg %p167
        %p492 = pneg %p164
        %s493 = sand.u32 %s182, 1
        %s494 = scalar_lea.sflag [#allocation12], %s493
        %s495 = sand.u32 %s182, 1
        %s496 = smul.addr %s495, 128
        %s497 = scalar_lea.vmem [#allocation11], %s496
        %p498 = pneg %p195
        %p499 = pneg %p192
        %s500 = smul.u32 2, %s35
        %p501 = scmp.lt.s32.totalorder %s500, 3
        %s502 = scalar_select %p501, %s500, 3
        %s503 = scalar_lea.vmem %s6, %s502
        %p504 = pneg %p221
        %p505 = pneg %p218
        %p506 = pneg %p247
        %p507 = pneg %p244
        %s508 = sand.u32 %s234, 1
        %s509 = scalar_lea.sflag [#allocation7], %s508
        %s510 = sand.u32 %s234, 1
        %s511 = smul.addr %s510, 16
        %s512 = scalar_lea.vmem [#allocation13], %s511
        %p513 = pneg %p273
        %p514 = pneg %p270
        %p515 = scmp.lt.s32.totalorder %s35, 1
        %s516 = scalar_select %p515, %s35, 1
        %s517 = scalar_lea.vmem %s8, %s516
        %p518 = pneg %p299
        %p519 = pneg %p296
        %p520 = scmp.lt.s32.totalorder %s35, 1
        %s521 = scalar_select %p520, %s35, 1
        %s522 = scalar_lea.vmem %s9, %s521
        %s523 = smul.u32 16, %s36
        %s524 = smul.u32 2, %s35
        %s525 = smul.u32 16, %s36
        %s526 = smul.u32 2, %s35
        %s527 = smul.u32 2, %s35
        %p528 = scmp.lt.s32.totalorder %s527, 3
        %s529 = scalar_select %p528, %s527, 3
        %s530 = scalar_lea.vmem %s3, %s529
        %s531 = smul.u32 2, %s35
        %s532 = smul.u32 2, %s35
        %p533 = scmp.lt.s32.totalorder %s532, 3
        %s534 = scalar_select %p533, %s532, 3
        %s535 = scalar_lea.vmem %s4, %s534
        %s536 = smul.u32 2, %s35
        %s537 = smul.u32 16, %s36
        %s538 = smul.u32 2, %s35
        %s539 = smul.u32 2, %s35
        %p540 = scmp.lt.s32.totalorder %s539, 3
        %s541 = scalar_select %p540, %s539, 3
        %s542 = scalar_lea.vmem %s6, %s541
        %s543 = smul.u32 2, %s35
        %s544 = smul.u32 2, %s35
        %p545 = scmp.lt.s32.totalorder %s35, 1
        %s546 = scalar_select %p545, %s35, 1
        %s547 = scalar_lea.vmem %s8, %s546
        %p548 = scmp.lt.s32.totalorder %s35, 1
        %s549 = scalar_select %p548, %s35, 1
        %s550 = scalar_lea.vmem %s9, %s549
        %p551 = scmp.eq.s32.totalorder %s36, 0
        // Predicated region
        $region65: #{tpu_custom_call.1} parent=47 // pred_check
          %p552 = pneg %p551
        $region66: #{tpu_custom_call.1} parent=47 // pred_check_branch
          %554 = sbr.rel (%p552) target = $region68
        $region67: #{tpu_custom_call.1} parent=47 // pred_region
          %v555 = vld [vmem:[%s535] sm:$0x3]
          %vm556 = vcmp.gt.f32.partialorder %v555, 20.0
          %v557 = vmul.f32 %v555, 1.442695
          %v558 = vpow.pop %v557
          %v559 = vadd.f32 %v558, 1.0
          %v560 = vlog2.pop %v559
          %v561 = vmul.f32 %v560, 0.6931472
          %v562 = vmul.f32 -0.5, %v558
          %v563 = vadd.f32 %v562, 1.0
          %v564 = vmul.f32 %v563, %v558
          %v565 = vand.u32 2147483647, %v558
          %vm566 = vcmp.lt.f32.partialorder %v565, 0.0004427343
          %v567 = vsel %vm566, %v564, %v561
          %v568 = vsel %vm556, %v555, %v567
          %v569 = vadd.f32 %v568, 1e-06
          %v570 = vld [vmem:[%s542] sm:$0x3]
          %v571 = vld [vmem:[%s530] sm:$0x3]
          %v572 = vmul.f32 %v569, %v570
          %v573 = vadd.f32 %v571, %v572
          %v575 = vlaneseq
          %v576 = vshrl.u32 %v575, 7
          %v577 = vsub.s32 0, %v576
          %v578 = vrot.slane %v573, %v577
          %v579 = vlaneseq
          %v580 = vshrl.u32 %v579, 7
          %v581 = vsub.s32 1, %v580
          %v582 = vrot.slane %v573, %v581
          %585 = vst [vmem:[%s512] sm:$0xff] %v578
          %586 = vst [vmem:[%s512 + $0x8] sm:$0xff] %v582
          %v587 = vlog2.pop %v569
          %v588 = vmul.f32 %v587, 0.6931472
          %v590 = vlaneseq
          %v591 = vshrl.u32 %v590, 7
          %v592 = vsub.s32 0, %v591
          %v593 = vrot.slane %v588, %v592
          %v594 = vlaneseq
          %v595 = vshrl.u32 %v594, 7
          %v596 = vsub.s32 1, %v595
          %v597 = vrot.slane %v588, %v596
          %vm600 = vcmask 1040384
          %v601 = vsel %vm600, %v593, 0.0
          %v602 = vsel %vm600, %v597, 0.0
          %v603 = vadd.f32 %v601, %v602
          %604 = vadd.xlane.f32.xlu0 %v603
          %v605 = vpop.xlane.xlu0 %604
          %v606 = vrot.slane %v605, 4
          %v607 = vadd.f32 %v605, %v606
          %v608 = vrot.slane %v607, 2
          %v609 = vadd.f32 %v607, %v608
          %v610 = vrot.slane %v609, 1
          %v611 = vadd.f32 %v609, %v610
          %s612 = vtos %v611
          %v613 = vstv %s612
          %vm614 = vcmask 0
          %615 = vst.msk [vmem:[#allocation2] sm:$0x1] %vm614, %v613
          %v616 = vmul.f32 %v570, %v570
          %v618 = vlaneseq
          %v619 = vshrl.u32 %v618, 7
          %v620 = vsub.s32 0, %v619
          %v621 = vrot.slane %v616, %v620
          %v622 = vlaneseq
          %v623 = vshrl.u32 %v622, 7
          %v624 = vsub.s32 1, %v623
          %v625 = vrot.slane %v616, %v624
          %v628 = vsel %vm600, %v621, 0.0
          %v629 = vsel %vm600, %v625, 0.0
          %v630 = vadd.f32 %v628, %v629
          %631 = vadd.xlane.f32.xlu0 %v630
          %v632 = vpop.xlane.xlu0 %631
          %v633 = vrot.slane %v632, 4
          %v634 = vadd.f32 %v632, %v633
          %v635 = vrot.slane %v634, 2
          %v636 = vadd.f32 %v634, %v635
          %v637 = vrot.slane %v636, 1
          %v638 = vadd.f32 %v636, %v637
          %s639 = vtos %v638
          %v640 = vstv %s639
          %641 = vst.msk [vmem:[#allocation3] sm:$0x1] %vm614, %v640
          %v642 = vmul.f32 %v573, %v573
          %v644 = vlaneseq
          %v645 = vshrl.u32 %v644, 7
          %v646 = vsub.s32 0, %v645
          %v647 = vrot.slane %v642, %v646
          %v648 = vlaneseq
          %v649 = vshrl.u32 %v648, 7
          %v650 = vsub.s32 1, %v649
          %v651 = vrot.slane %v642, %v650
          %v654 = vsel %vm600, %v647, 0.0
          %v655 = vsel %vm600, %v651, 0.0
          %v656 = vadd.f32 %v654, %v655
          %657 = vadd.xlane.f32.xlu0 %v656
          %v658 = vpop.xlane.xlu0 %657
          %v659 = vrot.slane %v658, 4
          %v660 = vadd.f32 %v658, %v659
          %v661 = vrot.slane %v660, 2
          %v662 = vadd.f32 %v660, %v661
          %v663 = vrot.slane %v662, 1
          %v664 = vadd.f32 %v662, %v663
          %s665 = vtos %v664
          %v666 = vstv %s665
          %667 = vst.msk [vmem:[#allocation4] sm:$0x1] %vm614, %v666
        $region68: #{tpu_custom_call.1} parent=47 // pred_fallthru
          _
        %v668 = vld [vmem:[%s460] sm:$0xff]
        %v669 = vld [vmem:[%s460 + $0x8] sm:$0xff]
        %v670 = vld [vmem:[%s460 + $0x10] sm:$0xff]
        %v671 = vld [vmem:[%s460 + $0x18] sm:$0xff]
        %v672 = vld [vmem:[%s460 + $0x20] sm:$0xff]
        %v673 = vld [vmem:[%s460 + $0x28] sm:$0xff]
        %v674 = vld [vmem:[%s460 + $0x30] sm:$0xff]
        %v675 = vld [vmem:[%s460 + $0x38] sm:$0xff]
        %v676 = vld [vmem:[%s460 + $0x40] sm:$0xff]
        %v677 = vld [vmem:[%s460 + $0x48] sm:$0xff]
        %v678 = vld [vmem:[%s460 + $0x50] sm:$0xff]
        %v679 = vld [vmem:[%s460 + $0x58] sm:$0xff]
        %v680 = vld [vmem:[%s460 + $0x60] sm:$0xff]
        %v681 = vld [vmem:[%s460 + $0x68] sm:$0xff]
        %v682 = vld [vmem:[%s460 + $0x70] sm:$0xff]
        %v683 = vld [vmem:[%s460 + $0x78] sm:$0xff]
        %v684 = vunpack.c.l.bf16 %v668
        %v685 = vunpack.c.h.bf16 %v668
        %v686 = vunpack.c.l.bf16 %v669
        %v687 = vunpack.c.h.bf16 %v669
        %v688 = vunpack.c.l.bf16 %v670
        %v689 = vunpack.c.h.bf16 %v670
        %v690 = vunpack.c.l.bf16 %v671
        %v691 = vunpack.c.h.bf16 %v671
        %v692 = vunpack.c.l.bf16 %v672
        %v693 = vunpack.c.h.bf16 %v672
        %v694 = vunpack.c.l.bf16 %v673
        %v695 = vunpack.c.h.bf16 %v673
        %v696 = vunpack.c.l.bf16 %v674
        %v697 = vunpack.c.h.bf16 %v674
        %v698 = vunpack.c.l.bf16 %v675
        %v699 = vunpack.c.h.bf16 %v675
        %v700 = vunpack.c.l.bf16 %v676
        %v701 = vunpack.c.h.bf16 %v676
        %v702 = vunpack.c.l.bf16 %v677
        %v703 = vunpack.c.h.bf16 %v677
        %v704 = vunpack.c.l.bf16 %v678
        %v705 = vunpack.c.h.bf16 %v678
        %v706 = vunpack.c.l.bf16 %v679
        %v707 = vunpack.c.h.bf16 %v679
        %v708 = vunpack.c.l.bf16 %v680
        %v709 = vunpack.c.h.bf16 %v680
        %v710 = vunpack.c.l.bf16 %v681
        %v711 = vunpack.c.h.bf16 %v681
        %v712 = vunpack.c.l.bf16 %v682
        %v713 = vunpack.c.h.bf16 %v682
        %v714 = vunpack.c.l.bf16 %v683
        %v715 = vunpack.c.h.bf16 %v683
        %v716 = vld [vmem:[%s451] sm:$0xff]
        %v717 = vld [vmem:[%s451 + $0x8] sm:$0xff]
        %v718 = vld [vmem:[%s451 + $0x10] sm:$0xff]
        %v719 = vld [vmem:[%s451 + $0x18] sm:$0xff]
        %v720 = vld [vmem:[%s451 + $0x20] sm:$0xff]
        %v721 = vld [vmem:[%s451 + $0x28] sm:$0xff]
        %v722 = vld [vmem:[%s451 + $0x30] sm:$0xff]
        %v723 = vld [vmem:[%s451 + $0x38] sm:$0xff]
        %v724 = vld [vmem:[%s451 + $0x40] sm:$0xff]
        %v725 = vld [vmem:[%s451 + $0x48] sm:$0xff]
        %v726 = vld [vmem:[%s451 + $0x50] sm:$0xff]
        %v727 = vld [vmem:[%s451 + $0x58] sm:$0xff]
        %v728 = vld [vmem:[%s451 + $0x60] sm:$0xff]
        %v729 = vld [vmem:[%s451 + $0x68] sm:$0xff]
        %v730 = vld [vmem:[%s451 + $0x70] sm:$0xff]
        %v731 = vld [vmem:[%s451 + $0x78] sm:$0xff]
        %v732 = vld [vmem:[%s451 + $0x80] sm:$0xff]
        %v733 = vld [vmem:[%s451 + $0x88] sm:$0xff]
        %v734 = vld [vmem:[%s451 + $0x90] sm:$0xff]
        %v735 = vld [vmem:[%s451 + $0x98] sm:$0xff]
        %v736 = vld [vmem:[%s451 + $0xa0] sm:$0xff]
        %v737 = vld [vmem:[%s451 + $0xa8] sm:$0xff]
        %v738 = vld [vmem:[%s451 + $0xb0] sm:$0xff]
        %v739 = vld [vmem:[%s451 + $0xb8] sm:$0xff]
        %v740 = vld [vmem:[%s451 + $0xc0] sm:$0xff]
        %v741 = vld [vmem:[%s451 + $0xc8] sm:$0xff]
        %v742 = vld [vmem:[%s451 + $0xd0] sm:$0xff]
        %v743 = vld [vmem:[%s451 + $0xd8] sm:$0xff]
        %v744 = vld [vmem:[%s451 + $0xe0] sm:$0xff]
        %v745 = vld [vmem:[%s451 + $0xe8] sm:$0xff]
        %v746 = vld [vmem:[%s451 + $0xf0] sm:$0xff]
        %v747 = vld [vmem:[%s451 + $0xf8] sm:$0xff]
        %vm748 = vcmp.gt.f32.partialorder %v716, 20.0
        %vm749 = vcmp.gt.f32.partialorder %v717, 20.0
        %vm750 = vcmp.gt.f32.partialorder %v718, 20.0
        %vm751 = vcmp.gt.f32.partialorder %v719, 20.0
        %vm752 = vcmp.gt.f32.partialorder %v720, 20.0
        %vm753 = vcmp.gt.f32.partialorder %v721, 20.0
        %vm754 = vcmp.gt.f32.partialorder %v722, 20.0
        %vm755 = vcmp.gt.f32.partialorder %v723, 20.0
        %vm756 = vcmp.gt.f32.partialorder %v724, 20.0
        %vm757 = vcmp.gt.f32.partialorder %v725, 20.0
        %vm758 = vcmp.gt.f32.partialorder %v726, 20.0
        %vm759 = vcmp.gt.f32.partialorder %v727, 20.0
        %vm760 = vcmp.gt.f32.partialorder %v728, 20.0
        %vm761 = vcmp.gt.f32.partialorder %v729, 20.0
        %vm762 = vcmp.gt.f32.partialorder %v730, 20.0
        %vm763 = vcmp.gt.f32.partialorder %v731, 20.0
        %vm764 = vcmp.gt.f32.partialorder %v732, 20.0
        %vm765 = vcmp.gt.f32.partialorder %v733, 20.0
        %vm766 = vcmp.gt.f32.partialorder %v734, 20.0
        %vm767 = vcmp.gt.f32.partialorder %v735, 20.0
        %vm768 = vcmp.gt.f32.partialorder %v736, 20.0
        %vm769 = vcmp.gt.f32.partialorder %v737, 20.0
        %vm770 = vcmp.gt.f32.partialorder %v738, 20.0
        %vm771 = vcmp.gt.f32.partialorder %v739, 20.0
        %vm772 = vcmp.gt.f32.partialorder %v740, 20.0
        %vm773 = vcmp.gt.f32.partialorder %v741, 20.0
        %vm774 = vcmp.gt.f32.partialorder %v742, 20.0
        %vm775 = vcmp.gt.f32.partialorder %v743, 20.0
        %vm776 = vcmp.gt.f32.partialorder %v744, 20.0
        %vm777 = vcmp.gt.f32.partialorder %v745, 20.0
        %vm778 = vcmp.gt.f32.partialorder %v746, 20.0
        %vm779 = vcmp.gt.f32.partialorder %v747, 20.0
        %v780 = vmul.f32 %v716, 1.442695
        %v781 = vpow.pop %v780
        %v782 = vmul.f32 %v717, 1.442695
        %v783 = vpow.pop %v782
        %v784 = vmul.f32 %v718, 1.442695
        %v785 = vpow.pop %v784
        %v786 = vmul.f32 %v719, 1.442695
        %v787 = vpow.pop %v786
        %v788 = vmul.f32 %v720, 1.442695
        %v789 = vpow.pop %v788
        %v790 = vmul.f32 %v721, 1.442695
        %v791 = vpow.pop %v790
        %v792 = vmul.f32 %v722, 1.442695
        %v793 = vpow.pop %v792
        %v794 = vmul.f32 %v723, 1.442695
        %v795 = vpow.pop %v794
        %v796 = vmul.f32 %v724, 1.442695
        %v797 = vpow.pop %v796
        %v798 = vmul.f32 %v725, 1.442695
        %v799 = vpow.pop %v798
        %v800 = vmul.f32 %v726, 1.442695
        %v801 = vpow.pop %v800
        %v802 = vmul.f32 %v727, 1.442695
        %v803 = vpow.pop %v802
        %v804 = vmul.f32 %v728, 1.442695
        %v805 = vpow.pop %v804
        %v806 = vmul.f32 %v729, 1.442695
        %v807 = vpow.pop %v806
        %v808 = vmul.f32 %v730, 1.442695
        %v809 = vpow.pop %v808
        %v810 = vmul.f32 %v731, 1.442695
        %v811 = vpow.pop %v810
        %v812 = vmul.f32 %v732, 1.442695
        %v813 = vpow.pop %v812
        %v814 = vmul.f32 %v733, 1.442695
        %v815 = vpow.pop %v814
        %v816 = vmul.f32 %v734, 1.442695
        %v817 = vpow.pop %v816
        %v818 = vmul.f32 %v735, 1.442695
        %v819 = vpow.pop %v818
        %v820 = vmul.f32 %v736, 1.442695
        %v821 = vpow.pop %v820
        %v822 = vmul.f32 %v737, 1.442695
        %v823 = vpow.pop %v822
        %v824 = vmul.f32 %v738, 1.442695
        %v825 = vpow.pop %v824
        %v826 = vmul.f32 %v739, 1.442695
        %v827 = vpow.pop %v826
        %v828 = vmul.f32 %v740, 1.442695
        %v829 = vpow.pop %v828
        %v830 = vmul.f32 %v741, 1.442695
        %v831 = vpow.pop %v830
        %v832 = vmul.f32 %v742, 1.442695
        %v833 = vpow.pop %v832
        %v834 = vmul.f32 %v743, 1.442695
        %v835 = vpow.pop %v834
        %v836 = vmul.f32 %v744, 1.442695
        %v837 = vpow.pop %v836
        %v838 = vmul.f32 %v745, 1.442695
        %v839 = vpow.pop %v838
        %v840 = vmul.f32 %v746, 1.442695
        %v841 = vpow.pop %v840
        %v842 = vmul.f32 %v747, 1.442695
        %v843 = vpow.pop %v842
        %v844 = vadd.f32 %v781, 1.0
        %v845 = vlog2.pop %v844
        %v846 = vmul.f32 %v845, 0.6931472
        %v847 = vmul.f32 -0.5, %v781
        %v848 = vadd.f32 %v847, 1.0
        %v849 = vmul.f32 %v848, %v781
        %v850 = vand.u32 2147483647, %v781
        %vm851 = vcmp.lt.f32.partialorder %v850, 0.0004427343
        %v852 = vsel %vm851, %v849, %v846
        %v853 = vadd.f32 %v783, 1.0
        %v854 = vlog2.pop %v853
        %v855 = vmul.f32 %v854, 0.6931472
        %v856 = vmul.f32 -0.5, %v783
        %v857 = vadd.f32 %v856, 1.0
        %v858 = vmul.f32 %v857, %v783
        %v859 = vand.u32 2147483647, %v783
        %vm860 = vcmp.lt.f32.partialorder %v859, 0.0004427343
        %v861 = vsel %vm860, %v858, %v855
        %v862 = vadd.f32 %v785, 1.0
        %v863 = vlog2.pop %v862
        %v864 = vmul.f32 %v863, 0.6931472
        %v865 = vmul.f32 -0.5, %v785
        %v866 = vadd.f32 %v865, 1.0
        %v867 = vmul.f32 %v866, %v785
        %v868 = vand.u32 2147483647, %v785
        %vm869 = vcmp.lt.f32.partialorder %v868, 0.0004427343
        %v870 = vsel %vm869, %v867, %v864
        %v871 = vadd.f32 %v787, 1.0
        %v872 = vlog2.pop %v871
        %v873 = vmul.f32 %v872, 0.6931472
        %v874 = vmul.f32 -0.5, %v787
        %v875 = vadd.f32 %v874, 1.0
        %v876 = vmul.f32 %v875, %v787
        %v877 = vand.u32 2147483647, %v787
        %vm878 = vcmp.lt.f32.partialorder %v877, 0.0004427343
        %v879 = vsel %vm878, %v876, %v873
        %v880 = vadd.f32 %v789, 1.0
        %v881 = vlog2.pop %v880
        %v882 = vmul.f32 %v881, 0.6931472
        %v883 = vmul.f32 -0.5, %v789
        %v884 = vadd.f32 %v883, 1.0
        %v885 = vmul.f32 %v884, %v789
        %v886 = vand.u32 2147483647, %v789
        %vm887 = vcmp.lt.f32.partialorder %v886, 0.0004427343
        %v888 = vsel %vm887, %v885, %v882
        %v889 = vadd.f32 %v791, 1.0
        %v890 = vlog2.pop %v889
        %v891 = vmul.f32 %v890, 0.6931472
        %v892 = vmul.f32 -0.5, %v791
        %v893 = vadd.f32 %v892, 1.0
        %v894 = vmul.f32 %v893, %v791
        %v895 = vand.u32 2147483647, %v791
        %vm896 = vcmp.lt.f32.partialorder %v895, 0.0004427343
        %v897 = vsel %vm896, %v894, %v891
        %v898 = vadd.f32 %v793, 1.0
        %v899 = vlog2.pop %v898
        %v900 = vmul.f32 %v899, 0.6931472
        %v901 = vmul.f32 -0.5, %v793
        %v902 = vadd.f32 %v901, 1.0
        %v903 = vmul.f32 %v902, %v793
        %v904 = vand.u32 2147483647, %v793
        %vm905 = vcmp.lt.f32.partialorder %v904, 0.0004427343
        %v906 = vsel %vm905, %v903, %v900
        %v907 = vadd.f32 %v795, 1.0
        %v908 = vlog2.pop %v907
        %v909 = vmul.f32 %v908, 0.6931472
        %v910 = vmul.f32 -0.5, %v795
        %v911 = vadd.f32 %v910, 1.0
        %v912 = vmul.f32 %v911, %v795
        %v913 = vand.u32 2147483647, %v795
        %vm914 = vcmp.lt.f32.partialorder %v913, 0.0004427343
        %v915 = vsel %vm914, %v912, %v909
        %v916 = vadd.f32 %v797, 1.0
        %v917 = vlog2.pop %v916
        %v918 = vmul.f32 %v917, 0.6931472
        %v919 = vmul.f32 -0.5, %v797
        %v920 = vadd.f32 %v919, 1.0
        %v921 = vmul.f32 %v920, %v797
        %v922 = vand.u32 2147483647, %v797
        %vm923 = vcmp.lt.f32.partialorder %v922, 0.0004427343
        %v924 = vsel %vm923, %v921, %v918
        %v925 = vadd.f32 %v799, 1.0
        %v926 = vlog2.pop %v925
        %v927 = vmul.f32 %v926, 0.6931472
        %v928 = vmul.f32 -0.5, %v799
        %v929 = vadd.f32 %v928, 1.0
        %v930 = vmul.f32 %v929, %v799
        %v931 = vand.u32 2147483647, %v799
        %vm932 = vcmp.lt.f32.partialorder %v931, 0.0004427343
        %v933 = vsel %vm932, %v930, %v927
        %v934 = vadd.f32 %v801, 1.0
        %v935 = vlog2.pop %v934
        %v936 = vmul.f32 %v935, 0.6931472
        %v937 = vmul.f32 -0.5, %v801
        %v938 = vadd.f32 %v937, 1.0
        %v939 = vmul.f32 %v938, %v801
        %v940 = vand.u32 2147483647, %v801
        %vm941 = vcmp.lt.f32.partialorder %v940, 0.0004427343
        %v942 = vsel %vm941, %v939, %v936
        %v943 = vadd.f32 %v803, 1.0
        %v944 = vlog2.pop %v943
        %v945 = vmul.f32 %v944, 0.6931472
        %v946 = vmul.f32 -0.5, %v803
        %v947 = vadd.f32 %v946, 1.0
        %v948 = vmul.f32 %v947, %v803
        %v949 = vand.u32 2147483647, %v803
        %vm950 = vcmp.lt.f32.partialorder %v949, 0.0004427343
        %v951 = vsel %vm950, %v948, %v945
        %v952 = vadd.f32 %v805, 1.0
        %v953 = vlog2.pop %v952
        %v954 = vmul.f32 %v953, 0.6931472
        %v955 = vmul.f32 -0.5, %v805
        %v956 = vadd.f32 %v955, 1.0
        %v957 = vmul.f32 %v956, %v805
        %v958 = vand.u32 2147483647, %v805
        %vm959 = vcmp.lt.f32.partialorder %v958, 0.0004427343
        %v960 = vsel %vm959, %v957, %v954
        %v961 = vadd.f32 %v807, 1.0
        %v962 = vlog2.pop %v961
        %v963 = vmul.f32 %v962, 0.6931472
        %v964 = vmul.f32 -0.5, %v807
        %v965 = vadd.f32 %v964, 1.0
        %v966 = vmul.f32 %v965, %v807
        %v967 = vand.u32 2147483647, %v807
        %vm968 = vcmp.lt.f32.partialorder %v967, 0.0004427343
        %v969 = vsel %vm968, %v966, %v963
        %v970 = vadd.f32 %v809, 1.0
        %v971 = vlog2.pop %v970
        %v972 = vmul.f32 %v971, 0.6931472
        %v973 = vmul.f32 -0.5, %v809
        %v974 = vadd.f32 %v973, 1.0
        %v975 = vmul.f32 %v974, %v809
        %v976 = vand.u32 2147483647, %v809
        %vm977 = vcmp.lt.f32.partialorder %v976, 0.0004427343
        %v978 = vsel %vm977, %v975, %v972
        %v979 = vadd.f32 %v811, 1.0
        %v980 = vlog2.pop %v979
        %v981 = vmul.f32 %v980, 0.6931472
        %v982 = vmul.f32 -0.5, %v811
        %v983 = vadd.f32 %v982, 1.0
        %v984 = vmul.f32 %v983, %v811
        %v985 = vand.u32 2147483647, %v811
        %vm986 = vcmp.lt.f32.partialorder %v985, 0.0004427343
        %v987 = vsel %vm986, %v984, %v981
        %v988 = vadd.f32 %v813, 1.0
        %v989 = vlog2.pop %v988
        %v990 = vmul.f32 %v989, 0.6931472
        %v991 = vmul.f32 -0.5, %v813
        %v992 = vadd.f32 %v991, 1.0
        %v993 = vmul.f32 %v992, %v813
        %v994 = vand.u32 2147483647, %v813
        %vm995 = vcmp.lt.f32.partialorder %v994, 0.0004427343
        %v996 = vsel %vm995, %v993, %v990
        %v997 = vadd.f32 %v815, 1.0
        %v998 = vlog2.pop %v997
        %v999 = vmul.f32 %v998, 0.6931472
        %v1000 = vmul.f32 -0.5, %v815
        %v1001 = vadd.f32 %v1000, 1.0
        %v1002 = vmul.f32 %v1001, %v815
        %v1003 = vand.u32 2147483647, %v815
        %vm1004 = vcmp.lt.f32.partialorder %v1003, 0.0004427343
        %v1005 = vsel %vm1004, %v1002, %v999
        %v1006 = vadd.f32 %v817, 1.0
        %v1007 = vlog2.pop %v1006
        %v1008 = vmul.f32 %v1007, 0.6931472
        %v1009 = vmul.f32 -0.5, %v817
        %v1010 = vadd.f32 %v1009, 1.0
        %v1011 = vmul.f32 %v1010, %v817
        %v1012 = vand.u32 2147483647, %v817
        %vm1013 = vcmp.lt.f32.partialorder %v1012, 0.0004427343
        %v1014 = vsel %vm1013, %v1011, %v1008
        %v1015 = vadd.f32 %v819, 1.0
        %v1016 = vlog2.pop %v1015
        %v1017 = vmul.f32 %v1016, 0.6931472
        %v1018 = vmul.f32 -0.5, %v819
        %v1019 = vadd.f32 %v1018, 1.0
        %v1020 = vmul.f32 %v1019, %v819
        %v1021 = vand.u32 2147483647, %v819
        %vm1022 = vcmp.lt.f32.partialorder %v1021, 0.0004427343
        %v1023 = vsel %vm1022, %v1020, %v1017
        %v1024 = vadd.f32 %v821, 1.0
        %v1025 = vlog2.pop %v1024
        %v1026 = vmul.f32 %v1025, 0.6931472
        %v1027 = vmul.f32 -0.5, %v821
        %v1028 = vadd.f32 %v1027, 1.0
        %v1029 = vmul.f32 %v1028, %v821
        %v1030 = vand.u32 2147483647, %v821
        %vm1031 = vcmp.lt.f32.partialorder %v1030, 0.0004427343
        %v1032 = vsel %vm1031, %v1029, %v1026
        %v1033 = vadd.f32 %v823, 1.0
        %v1034 = vlog2.pop %v1033
        %v1035 = vmul.f32 %v1034, 0.6931472
        %v1036 = vmul.f32 -0.5, %v823
        %v1037 = vadd.f32 %v1036, 1.0
        %v1038 = vmul.f32 %v1037, %v823
        %v1039 = vand.u32 2147483647, %v823
        %vm1040 = vcmp.lt.f32.partialorder %v1039, 0.0004427343
        %v1041 = vsel %vm1040, %v1038, %v1035
        %v1042 = vadd.f32 %v825, 1.0
        %v1043 = vlog2.pop %v1042
        %v1044 = vmul.f32 %v1043, 0.6931472
        %v1045 = vmul.f32 -0.5, %v825
        %v1046 = vadd.f32 %v1045, 1.0
        %v1047 = vmul.f32 %v1046, %v825
        %v1048 = vand.u32 2147483647, %v825
        %vm1049 = vcmp.lt.f32.partialorder %v1048, 0.0004427343
        %v1050 = vsel %vm1049, %v1047, %v1044
        %v1051 = vadd.f32 %v827, 1.0
        %v1052 = vlog2.pop %v1051
        %v1053 = vmul.f32 %v1052, 0.6931472
        %v1054 = vmul.f32 -0.5, %v827
        %v1055 = vadd.f32 %v1054, 1.0
        %v1056 = vmul.f32 %v1055, %v827
        %v1057 = vand.u32 2147483647, %v827
        %vm1058 = vcmp.lt.f32.partialorder %v1057, 0.0004427343
        %v1059 = vsel %vm1058, %v1056, %v1053
        %v1060 = vadd.f32 %v829, 1.0
        %v1061 = vlog2.pop %v1060
        %v1062 = vmul.f32 %v1061, 0.6931472
        %v1063 = vmul.f32 -0.5, %v829
        %v1064 = vadd.f32 %v1063, 1.0
        %v1065 = vmul.f32 %v1064, %v829
        %v1066 = vand.u32 2147483647, %v829
        %vm1067 = vcmp.lt.f32.partialorder %v1066, 0.0004427343
        %v1068 = vsel %vm1067, %v1065, %v1062
        %v1069 = vadd.f32 %v831, 1.0
        %v1070 = vlog2.pop %v1069
        %v1071 = vmul.f32 %v1070, 0.6931472
        %v1072 = vmul.f32 -0.5, %v831
        %v1073 = vadd.f32 %v1072, 1.0
        %v1074 = vmul.f32 %v1073, %v831
        %v1075 = vand.u32 2147483647, %v831
        %vm1076 = vcmp.lt.f32.partialorder %v1075, 0.0004427343
        %v1077 = vsel %vm1076, %v1074, %v1071
        %v1078 = vadd.f32 %v833, 1.0
        %v1079 = vlog2.pop %v1078
        %v1080 = vmul.f32 %v1079, 0.6931472
        %v1081 = vmul.f32 -0.5, %v833
        %v1082 = vadd.f32 %v1081, 1.0
        %v1083 = vmul.f32 %v1082, %v833
        %v1084 = vand.u32 2147483647, %v833
        %vm1085 = vcmp.lt.f32.partialorder %v1084, 0.0004427343
        %v1086 = vsel %vm1085, %v1083, %v1080
        %v1087 = vadd.f32 %v835, 1.0
        %v1088 = vlog2.pop %v1087
        %v1089 = vmul.f32 %v1088, 0.6931472
        %v1090 = vmul.f32 -0.5, %v835
        %v1091 = vadd.f32 %v1090, 1.0
        %v1092 = vmul.f32 %v1091, %v835
        %v1093 = vand.u32 2147483647, %v835
        %vm1094 = vcmp.lt.f32.partialorder %v1093, 0.0004427343
        %v1095 = vsel %vm1094, %v1092, %v1089
        %v1096 = vadd.f32 %v837, 1.0
        %v1097 = vlog2.pop %v1096
        %v1098 = vmul.f32 %v1097, 0.6931472
        %v1099 = vmul.f32 -0.5, %v837
        %v1100 = vadd.f32 %v1099, 1.0
        %v1101 = vmul.f32 %v1100, %v837
        %v1102 = vand.u32 2147483647, %v837
        %vm1103 = vcmp.lt.f32.partialorder %v1102, 0.0004427343
        %v1104 = vsel %vm1103, %v1101, %v1098
        %v1105 = vadd.f32 %v839, 1.0
        %v1106 = vlog2.pop %v1105
        %v1107 = vmul.f32 %v1106, 0.6931472
        %v1108 = vmul.f32 -0.5, %v839
        %v1109 = vadd.f32 %v1108, 1.0
        %v1110 = vmul.f32 %v1109, %v839
        %v1111 = vand.u32 2147483647, %v839
        %vm1112 = vcmp.lt.f32.partialorder %v1111, 0.0004427343
        %v1113 = vsel %vm1112, %v1110, %v1107
        %v1114 = vadd.f32 %v841, 1.0
        %v1115 = vlog2.pop %v1114
        %v1116 = vmul.f32 %v1115, 0.6931472
        %v1117 = vmul.f32 -0.5, %v841
        %v1118 = vadd.f32 %v1117, 1.0
        %v1119 = vmul.f32 %v1118, %v841
        %v1120 = vand.u32 2147483647, %v841
        %vm1121 = vcmp.lt.f32.partialorder %v1120, 0.0004427343
        %v1122 = vsel %vm1121, %v1119, %v1116
        %v1123 = vadd.f32 %v843, 1.0
        %v1124 = vlog2.pop %v1123
        %v1125 = vmul.f32 %v1124, 0.6931472
        %v1126 = vmul.f32 -0.5, %v843
        %v1127 = vadd.f32 %v1126, 1.0
        %v1128 = vmul.f32 %v1127, %v843
        %v1129 = vand.u32 2147483647, %v843
        %vm1130 = vcmp.lt.f32.partialorder %v1129, 0.0004427343
        %v1131 = vsel %vm1130, %v1128, %v1125
        %v1132 = vsel %vm748, %v716, %v852
        %v1133 = vsel %vm749, %v717, %v861
        %v1134 = vsel %vm750, %v718, %v870
        %v1135 = vsel %vm751, %v719, %v879
        %v1136 = vsel %vm752, %v720, %v888
        %v1137 = vsel %vm753, %v721, %v897
        %v1138 = vsel %vm754, %v722, %v906
        %v1139 = vsel %vm755, %v723, %v915
        %v1140 = vsel %vm756, %v724, %v924
        %v1141 = vsel %vm757, %v725, %v933
        %v1142 = vsel %vm758, %v726, %v942
        %v1143 = vsel %vm759, %v727, %v951
        %v1144 = vsel %vm760, %v728, %v960
        %v1145 = vsel %vm761, %v729, %v969
        %v1146 = vsel %vm762, %v730, %v978
        %v1147 = vsel %vm763, %v731, %v987
        %v1148 = vsel %vm764, %v732, %v996
        %v1149 = vsel %vm765, %v733, %v1005
        %v1150 = vsel %vm766, %v734, %v1014
        %v1151 = vsel %vm767, %v735, %v1023
        %v1152 = vsel %vm768, %v736, %v1032
        %v1153 = vsel %vm769, %v737, %v1041
        %v1154 = vsel %vm770, %v738, %v1050
        %v1155 = vsel %vm771, %v739, %v1059
        %v1156 = vsel %vm772, %v740, %v1068
        %v1157 = vsel %vm773, %v741, %v1077
        %v1158 = vsel %vm774, %v742, %v1086
        %v1159 = vsel %vm775, %v743, %v1095
        %v1160 = vsel %vm776, %v744, %v1104
        %v1161 = vsel %vm777, %v745, %v1113
        %v1162 = vsel %vm778, %v746, %v1122
        %v1163 = vsel %vm779, %v747, %v1131
        %v1164 = vadd.f32 %v1132, 1e-06
        %v1165 = vadd.f32 %v1133, 1e-06
        %v1166 = vadd.f32 %v1134, 1e-06
        %v1167 = vadd.f32 %v1135, 1e-06
        %v1168 = vadd.f32 %v1136, 1e-06
        %v1169 = vadd.f32 %v1137, 1e-06
        %v1170 = vadd.f32 %v1138, 1e-06
        %v1171 = vadd.f32 %v1139, 1e-06
        %v1172 = vadd.f32 %v1140, 1e-06
        %v1173 = vadd.f32 %v1141, 1e-06
        %v1174 = vadd.f32 %v1142, 1e-06
        %v1175 = vadd.f32 %v1143, 1e-06
        %v1176 = vadd.f32 %v1144, 1e-06
        %v1177 = vadd.f32 %v1145, 1e-06
        %v1178 = vadd.f32 %v1146, 1e-06
        %v1179 = vadd.f32 %v1147, 1e-06
        %v1180 = vadd.f32 %v1148, 1e-06
        %v1181 = vadd.f32 %v1149, 1e-06
        %v1182 = vadd.f32 %v1150, 1e-06
        %v1183 = vadd.f32 %v1151, 1e-06
        %v1184 = vadd.f32 %v1152, 1e-06
        %v1185 = vadd.f32 %v1153, 1e-06
        %v1186 = vadd.f32 %v1154, 1e-06
        %v1187 = vadd.f32 %v1155, 1e-06
        %v1188 = vadd.f32 %v1156, 1e-06
        %v1189 = vadd.f32 %v1157, 1e-06
        %v1190 = vadd.f32 %v1158, 1e-06
        %v1191 = vadd.f32 %v1159, 1e-06
        %v1192 = vadd.f32 %v1160, 1e-06
        %v1193 = vadd.f32 %v1161, 1e-06
        %v1194 = vadd.f32 %v1162, 1e-06
        %v1195 = vadd.f32 %v1163, 1e-06
        %v1196 = vld [vmem:[%s442] sm:$0xff]
        %v1197 = vld [vmem:[%s442 + $0x8] sm:$0xff]
        %v1198 = vld [vmem:[%s442 + $0x10] sm:$0xff]
        %v1199 = vld [vmem:[%s442 + $0x18] sm:$0xff]
        %v1200 = vld [vmem:[%s442 + $0x20] sm:$0xff]
        %v1201 = vld [vmem:[%s442 + $0x28] sm:$0xff]
        %v1202 = vld [vmem:[%s442 + $0x30] sm:$0xff]
        %v1203 = vld [vmem:[%s442 + $0x38] sm:$0xff]
        %v1204 = vld [vmem:[%s442 + $0x40] sm:$0xff]
        %v1205 = vld [vmem:[%s442 + $0x48] sm:$0xff]
        %v1206 = vld [vmem:[%s442 + $0x50] sm:$0xff]
        %v1207 = vld [vmem:[%s442 + $0x58] sm:$0xff]
        %v1208 = vld [vmem:[%s442 + $0x60] sm:$0xff]
        %v1209 = vld [vmem:[%s442 + $0x68] sm:$0xff]
        %v1210 = vld [vmem:[%s442 + $0x70] sm:$0xff]
        %v1211 = vld [vmem:[%s442 + $0x78] sm:$0xff]
        %v1212 = vld [vmem:[%s442 + $0x80] sm:$0xff]
        %v1213 = vld [vmem:[%s442 + $0x88] sm:$0xff]
        %v1214 = vld [vmem:[%s442 + $0x90] sm:$0xff]
        %v1215 = vld [vmem:[%s442 + $0x98] sm:$0xff]
        %v1216 = vld [vmem:[%s442 + $0xa0] sm:$0xff]
        %v1217 = vld [vmem:[%s442 + $0xa8] sm:$0xff]
        %v1218 = vld [vmem:[%s442 + $0xb0] sm:$0xff]
        %v1219 = vld [vmem:[%s442 + $0xb8] sm:$0xff]
        %v1220 = vld [vmem:[%s442 + $0xc0] sm:$0xff]
        %v1221 = vld [vmem:[%s442 + $0xc8] sm:$0xff]
        %v1222 = vld [vmem:[%s442 + $0xd0] sm:$0xff]
        %v1223 = vld [vmem:[%s442 + $0xd8] sm:$0xff]
        %v1224 = vld [vmem:[%s442 + $0xe0] sm:$0xff]
        %v1225 = vld [vmem:[%s442 + $0xe8] sm:$0xff]
        %v1226 = vld [vmem:[%s442 + $0xf0] sm:$0xff]
        %v1227 = vld [vmem:[%s442 + $0xf8] sm:$0xff]
        %v1228 = vmul.f32 %v1164, %v684
        %v1229 = vmul.f32 %v1165, %v685
        %v1230 = vmul.f32 %v1166, %v686
        %v1231 = vmul.f32 %v1167, %v687
        %v1232 = vmul.f32 %v1168, %v688
        %v1233 = vmul.f32 %v1169, %v689
        %v1234 = vmul.f32 %v1170, %v690
        %v1235 = vmul.f32 %v1171, %v691
        %v1236 = vmul.f32 %v1172, %v692
        %v1237 = vmul.f32 %v1173, %v693
        %v1238 = vmul.f32 %v1174, %v694
        %v1239 = vmul.f32 %v1175, %v695
        %v1240 = vmul.f32 %v1176, %v696
        %v1241 = vmul.f32 %v1177, %v697
        %v1242 = vmul.f32 %v1178, %v698
        %v1243 = vmul.f32 %v1179, %v699
        %v1244 = vmul.f32 %v1180, %v700
        %v1245 = vmul.f32 %v1181, %v701
        %v1246 = vmul.f32 %v1182, %v702
        %v1247 = vmul.f32 %v1183, %v703
        %v1248 = vmul.f32 %v1184, %v704
        %v1249 = vmul.f32 %v1185, %v705
        %v1250 = vmul.f32 %v1186, %v706
        %v1251 = vmul.f32 %v1187, %v707
        %v1252 = vmul.f32 %v1188, %v708
        %v1253 = vmul.f32 %v1189, %v709
        %v1254 = vmul.f32 %v1190, %v710
        %v1255 = vmul.f32 %v1191, %v711
        %v1256 = vmul.f32 %v1192, %v712
        %v1257 = vmul.f32 %v1193, %v713
        %v1258 = vmul.f32 %v1194, %v714
        %v1259 = vmul.f32 %v1195, %v715
        %v1260 = vadd.f32 %v1196, %v1228
        %v1261 = vadd.f32 %v1197, %v1229
        %v1262 = vadd.f32 %v1198, %v1230
        %v1263 = vadd.f32 %v1199, %v1231
        %v1264 = vadd.f32 %v1200, %v1232
        %v1265 = vadd.f32 %v1201, %v1233
        %v1266 = vadd.f32 %v1202, %v1234
        %v1267 = vadd.f32 %v1203, %v1235
        %v1268 = vadd.f32 %v1204, %v1236
        %v1269 = vadd.f32 %v1205, %v1237
        %v1270 = vadd.f32 %v1206, %v1238
        %v1271 = vadd.f32 %v1207, %v1239
        %v1272 = vadd.f32 %v1208, %v1240
        %v1273 = vadd.f32 %v1209, %v1241
        %v1274 = vadd.f32 %v1210, %v1242
        %v1275 = vadd.f32 %v1211, %v1243
        %v1276 = vadd.f32 %v1212, %v1244
        %v1277 = vadd.f32 %v1213, %v1245
        %v1278 = vadd.f32 %v1214, %v1246
        %v1279 = vadd.f32 %v1215, %v1247
        %v1280 = vadd.f32 %v1216, %v1248
        %v1281 = vadd.f32 %v1217, %v1249
        %v1282 = vadd.f32 %v1218, %v1250
        %v1283 = vadd.f32 %v1219, %v1251
        %v1284 = vadd.f32 %v1220, %v1252
        %v1285 = vadd.f32 %v1221, %v1253
        %v1286 = vadd.f32 %v1222, %v1254
        %v1287 = vadd.f32 %v1223, %v1255
        %v1288 = vadd.f32 %v1224, %v1256
        %v1289 = vadd.f32 %v1225, %v1257
        %v1290 = vadd.f32 %v1226, %v1258
        %v1291 = vadd.f32 %v1227, %v1259
        %s1292 = smul.u32 %s36, 8
        %s1293 = scalar_lea.vmem [#allocation5], %s1292
        %v1294 = vld [vmem:[%s1293] sm:$0xff]
        %v1295 = vld [vmem:[%s512] sm:$0xff]
        %v1296 = vld [vmem:[%s512 + $0x8] sm:$0xff]
        %1297 = vmatprep.subr.mxu0 %v1261
        %1298 = vmatpush1.msra.mxu0 %v1260
        %1299 = vmatprep.subr.mxu0 %v1263
        %1300 = vmatpush1.msra.mxu0 %v1262
        %1301 = vmatprep.subr.mxu0 %v1265
        %1302 = vmatpush1.msra.mxu0 %v1264
        %1303 = vmatprep.subr.mxu0 %v1267
        %1304 = vmatpush1.msra.mxu0 %v1266
        %1305 = vmatprep.subr.mxu0 %v1269
        %1306 = vmatpush1.msra.mxu0 %v1268
        %1307 = vmatprep.subr.mxu0 %v1271
        %1308 = vmatpush1.msra.mxu0 %v1270
        %1309 = vmatprep.subr.mxu0 %v1273
        %1310 = vmatpush1.msra.mxu0 %v1272
        %1311 = vmatprep.subr.mxu0 %v1275
        %1312 = vmatpush1.msra.mxu0 %v1274
        %1313 = vmatprep.subr.mxu0 %v1277
        %1314 = vmatpush1.msra.mxu0 %v1276
        %1315 = vmatprep.subr.mxu0 %v1279
        %1316 = vmatpush1.msra.mxu0 %v1278
        %1317 = vmatprep.subr.mxu0 %v1281
        %1318 = vmatpush1.msra.mxu0 %v1280
        %1319 = vmatprep.subr.mxu0 %v1283
        %1320 = vmatpush1.msra.mxu0 %v1282
        %1321 = vmatprep.subr.mxu0 %v1285
        %1322 = vmatpush1.msra.mxu0 %v1284
        %1323 = vmatprep.subr.mxu0 %v1287
        %1324 = vmatpush1.msra.mxu0 %v1286
        %1325 = vmatprep.subr.mxu0 %v1289
        %1326 = vmatpush1.msra.mxu0 %v1288
        %1327 = vmatprep.subr.mxu0 %v1291
        %1328 = vmatpush1.msra.mxu0 %v1290
        %1329 = vmatprep.subr.mxu0 0.0
        %1330 = vmatpush1.msra.mxu0 0.0
        %1331 = vmatprep.subr.mxu0 0.0
        %1332 = vmatpush1.msra.mxu0 0.0
        %1333 = vmatprep.subr.mxu0 0.0
        %1334 = vmatpush1.msra.mxu0 0.0
        %1335 = vmatprep.subr.mxu0 0.0
        %1336 = vmatpush1.msra.mxu0 0.0
        %1337 = vmatprep.subr.mxu0 0.0
        %1338 = vmatpush1.msra.mxu0 0.0
        %1339 = vmatprep.subr.mxu0 0.0
        %1340 = vmatpush1.msra.mxu0 0.0
        %1341 = vmatprep.subr.mxu0 0.0
        %1342 = vmatpush1.msra.mxu0 0.0
        %1343 = vmatprep.subr.mxu0 0.0
        %1344 = vmatpush1.msra.mxu0 0.0
        %1345 = vmatprep.subr.mxu0 0.0
        %1346 = vmatpush1.msra.mxu0 0.0
        %1347 = vmatprep.subr.mxu0 0.0
        %1348 = vmatpush1.msra.mxu0 0.0
        %1349 = vmatprep.subr.mxu0 0.0
        %1350 = vmatpush1.msra.mxu0 0.0
        %1351 = vmatprep.subr.mxu0 0.0
        %1352 = vmatpush1.msra.mxu0 0.0
        %1353 = vmatprep.subr.mxu0 0.0
        %1354 = vmatpush1.msra.mxu0 0.0
        %1355 = vmatprep.subr.mxu0 0.0
        %1356 = vmatpush1.msra.mxu0 0.0
        %1357 = vmatprep.subr.mxu0 0.0
        %1358 = vmatpush1.msra.mxu0 0.0
        %1359 = vmatprep.subr.mxu0 0.0
        %1360 = vmatpush1.msra.mxu0 0.0
        %1361 = vmatprep.mubr.f32.mxu0 0.0
        %1362 = vmatmul.mubr.f32.gmra.mrb[0].mxu0 %v1294
        %v1363 = vpop.f32.mrb[0].mxu0
        %v1364 = vadd.f32 0.0, %v1363
        %v1365 = vpop.f32.mrb[0].mxu0
        %v1366 = vadd.f32 0.0, %v1365
        %1367 = vdwg.mxu0
        %v1368 = vadd.f32 %v1295, %v1364
        %v1369 = vadd.f32 %v1296, %v1366
        %1370 = vst [vmem:[%s512] sm:$0xff] %v1368
        %1371 = vst [vmem:[%s512 + $0x8] sm:$0xff] %v1369
        %v1372 = vld [vmem:[#allocation2] sm:$0x1]
        %v1373 = vlog2.pop %v1164
        %v1374 = vmul.f32 %v1373, 0.6931472
        %v1375 = vlog2.pop %v1165
        %v1376 = vmul.f32 %v1375, 0.6931472
        %v1377 = vlog2.pop %v1166
        %v1378 = vmul.f32 %v1377, 0.6931472
        %v1379 = vlog2.pop %v1167
        %v1380 = vmul.f32 %v1379, 0.6931472
        %v1381 = vlog2.pop %v1168
        %v1382 = vmul.f32 %v1381, 0.6931472
        %v1383 = vlog2.pop %v1169
        %v1384 = vmul.f32 %v1383, 0.6931472
        %v1385 = vlog2.pop %v1170
        %v1386 = vmul.f32 %v1385, 0.6931472
        %v1387 = vlog2.pop %v1171
        %v1388 = vmul.f32 %v1387, 0.6931472
        %v1389 = vlog2.pop %v1172
        %v1390 = vmul.f32 %v1389, 0.6931472
        %v1391 = vlog2.pop %v1173
        %v1392 = vmul.f32 %v1391, 0.6931472
        %v1393 = vlog2.pop %v1174
        %v1394 = vmul.f32 %v1393, 0.6931472
        %v1395 = vlog2.pop %v1175
        %v1396 = vmul.f32 %v1395, 0.6931472
        %v1397 = vlog2.pop %v1176
        %v1398 = vmul.f32 %v1397, 0.6931472
        %v1399 = vlog2.pop %v1177
        %v1400 = vmul.f32 %v1399, 0.6931472
        %v1401 = vlog2.pop %v1178
        %v1402 = vmul.f32 %v1401, 0.6931472
        %v1403 = vlog2.pop %v1179
        %v1404 = vmul.f32 %v1403, 0.6931472
        %v1405 = vlog2.pop %v1180
        %v1406 = vmul.f32 %v1405, 0.6931472
        %v1407 = vlog2.pop %v1181
        %v1408 = vmul.f32 %v1407, 0.6931472
        %v1409 = vlog2.pop %v1182
        %v1410 = vmul.f32 %v1409, 0.6931472
        %v1411 = vlog2.pop %v1183
        %v1412 = vmul.f32 %v1411, 0.6931472
        %v1413 = vlog2.pop %v1184
        %v1414 = vmul.f32 %v1413, 0.6931472
        %v1415 = vlog2.pop %v1185
        %v1416 = vmul.f32 %v1415, 0.6931472
        %v1417 = vlog2.pop %v1186
        %v1418 = vmul.f32 %v1417, 0.6931472
        %v1419 = vlog2.pop %v1187
        %v1420 = vmul.f32 %v1419, 0.6931472
        %v1421 = vlog2.pop %v1188
        %v1422 = vmul.f32 %v1421, 0.6931472
        %v1423 = vlog2.pop %v1189
        %v1424 = vmul.f32 %v1423, 0.6931472
        %v1425 = vlog2.pop %v1190
        %v1426 = vmul.f32 %v1425, 0.6931472
        %v1427 = vlog2.pop %v1191
        %v1428 = vmul.f32 %v1427, 0.6931472
        %v1429 = vlog2.pop %v1192
        %v1430 = vmul.f32 %v1429, 0.6931472
        %v1431 = vlog2.pop %v1193
        %v1432 = vmul.f32 %v1431, 0.6931472
        %v1433 = vlog2.pop %v1194
        %v1434 = vmul.f32 %v1433, 0.6931472
        %v1435 = vlog2.pop %v1195
        %v1436 = vmul.f32 %v1435, 0.6931472
        %v1437 = vadd.f32 %v1374, %v1376
        %v1438 = vadd.f32 %v1437, %v1378
        %v1439 = vadd.f32 %v1438, %v1380
        %v1440 = vadd.f32 %v1439, %v1382
        %v1441 = vadd.f32 %v1440, %v1384
        %v1442 = vadd.f32 %v1441, %v1386
        %v1443 = vadd.f32 %v1442, %v1388
        %v1444 = vadd.f32 %v1443, %v1390
        %v1445 = vadd.f32 %v1444, %v1392
        %v1446 = vadd.f32 %v1445, %v1394
        %v1447 = vadd.f32 %v1446, %v1396
        %v1448 = vadd.f32 %v1447, %v1398
        %v1449 = vadd.f32 %v1448, %v1400
        %v1450 = vadd.f32 %v1449, %v1402
        %v1451 = vadd.f32 %v1450, %v1404
        %v1452 = vadd.f32 %v1451, %v1406
        %v1453 = vadd.f32 %v1452, %v1408
        %v1454 = vadd.f32 %v1453, %v1410
        %v1455 = vadd.f32 %v1454, %v1412
        %v1456 = vadd.f32 %v1455, %v1414
        %v1457 = vadd.f32 %v1456, %v1416
        %v1458 = vadd.f32 %v1457, %v1418
        %v1459 = vadd.f32 %v1458, %v1420
        %v1460 = vadd.f32 %v1459, %v1422
        %v1461 = vadd.f32 %v1460, %v1424
        %v1462 = vadd.f32 %v1461, %v1426
        %v1463 = vadd.f32 %v1462, %v1428
        %v1464 = vadd.f32 %v1463, %v1430
        %v1465 = vadd.f32 %v1464, %v1432
        %v1466 = vadd.f32 %v1465, %v1434
        %v1467 = vadd.f32 %v1466, %v1436
        %1468 = vadd.xlane.f32.xlu0 %v1467
        %v1469 = vpop.xlane.xlu0 %1468
        %v1470 = vrot.slane %v1469, 4
        %v1471 = vadd.f32 %v1469, %v1470
        %v1472 = vrot.slane %v1471, 2
        %v1473 = vadd.f32 %v1471, %v1472
        %v1474 = vrot.slane %v1473, 1
        %v1475 = vadd.f32 %v1473, %v1474
        %s1476 = vtos %v1475
        %v1477 = vstv %s1476
        %v1478 = vadd.f32 %v1372, %v1477
        %vm1479 = vcmask 0
        %1480 = vst.msk [vmem:[#allocation2] sm:$0x1] %vm1479, %v1478
        %v1481 = vld [vmem:[#allocation3] sm:$0x1]
        %v1482 = vmul.f32 %v684, %v684
        %v1483 = vmul.f32 %v685, %v685
        %v1484 = vmul.f32 %v686, %v686
        %v1485 = vmul.f32 %v687, %v687
        %v1486 = vmul.f32 %v688, %v688
        %v1487 = vmul.f32 %v689, %v689
        %v1488 = vmul.f32 %v690, %v690
        %v1489 = vmul.f32 %v691, %v691
        %v1490 = vmul.f32 %v692, %v692
        %v1491 = vmul.f32 %v693, %v693
        %v1492 = vmul.f32 %v694, %v694
        %v1493 = vmul.f32 %v695, %v695
        %v1494 = vmul.f32 %v696, %v696
        %v1495 = vmul.f32 %v697, %v697
        %v1496 = vmul.f32 %v698, %v698
        %v1497 = vmul.f32 %v699, %v699
        %v1498 = vmul.f32 %v700, %v700
        %v1499 = vmul.f32 %v701, %v701
        %v1500 = vmul.f32 %v702, %v702
        %v1501 = vmul.f32 %v703, %v703
        %v1502 = vmul.f32 %v704, %v704
        %v1503 = vmul.f32 %v705, %v705
        %v1504 = vmul.f32 %v706, %v706
        %v1505 = vmul.f32 %v707, %v707
        %v1506 = vmul.f32 %v708, %v708
        %v1507 = vmul.f32 %v709, %v709
        %v1508 = vmul.f32 %v710, %v710
        %v1509 = vmul.f32 %v711, %v711
        %v1510 = vmul.f32 %v712, %v712
        %v1511 = vmul.f32 %v713, %v713
        %v1512 = vmul.f32 %v714, %v714
        %v1513 = vmul.f32 %v715, %v715
        %v1514 = vadd.f32 %v1482, %v1483
        %v1515 = vadd.f32 %v1514, %v1484
        %v1516 = vadd.f32 %v1515, %v1485
        %v1517 = vadd.f32 %v1516, %v1486
        %v1518 = vadd.f32 %v1517, %v1487
        %v1519 = vadd.f32 %v1518, %v1488
        %v1520 = vadd.f32 %v1519, %v1489
        %v1521 = vadd.f32 %v1520, %v1490
        %v1522 = vadd.f32 %v1521, %v1491
        %v1523 = vadd.f32 %v1522, %v1492
        %v1524 = vadd.f32 %v1523, %v1493
        %v1525 = vadd.f32 %v1524, %v1494
        %v1526 = vadd.f32 %v1525, %v1495
        %v1527 = vadd.f32 %v1526, %v1496
        %v1528 = vadd.f32 %v1527, %v1497
        %v1529 = vadd.f32 %v1528, %v1498
        %v1530 = vadd.f32 %v1529, %v1499
        %v1531 = vadd.f32 %v1530, %v1500
        %v1532 = vadd.f32 %v1531, %v1501
        %v1533 = vadd.f32 %v1532, %v1502
        %v1534 = vadd.f32 %v1533, %v1503
        %v1535 = vadd.f32 %v1534, %v1504
        %v1536 = vadd.f32 %v1535, %v1505
        %v1537 = vadd.f32 %v1536, %v1506
        %v1538 = vadd.f32 %v1537, %v1507
        %v1539 = vadd.f32 %v1538, %v1508
        %v1540 = vadd.f32 %v1539, %v1509
        %v1541 = vadd.f32 %v1540, %v1510
        %v1542 = vadd.f32 %v1541, %v1511
        %v1543 = vadd.f32 %v1542, %v1512
        %v1544 = vadd.f32 %v1543, %v1513
        %1545 = vadd.xlane.f32.xlu0 %v1544
        %v1546 = vpop.xlane.xlu0 %1545
        %v1547 = vrot.slane %v1546, 4
        %v1548 = vadd.f32 %v1546, %v1547
        %v1549 = vrot.slane %v1548, 2
        %v1550 = vadd.f32 %v1548, %v1549
        %v1551 = vrot.slane %v1550, 1
        %v1552 = vadd.f32 %v1550, %v1551
        %s1553 = vtos %v1552
        %v1554 = vstv %s1553
        %v1555 = vadd.f32 %v1481, %v1554
        %1556 = vst.msk [vmem:[#allocation3] sm:$0x1] %vm1479, %v1555
        %v1557 = vld [vmem:[#allocation4] sm:$0x1]
        %v1558 = vmul.f32 %v1260, %v1260
        %v1559 = vmul.f32 %v1261, %v1261
        %v1560 = vmul.f32 %v1262, %v1262
        %v1561 = vmul.f32 %v1263, %v1263
        %v1562 = vmul.f32 %v1264, %v1264
        %v1563 = vmul.f32 %v1265, %v1265
        %v1564 = vmul.f32 %v1266, %v1266
        %v1565 = vmul.f32 %v1267, %v1267
        %v1566 = vmul.f32 %v1268, %v1268
        %v1567 = vmul.f32 %v1269, %v1269
        %v1568 = vmul.f32 %v1270, %v1270
        %v1569 = vmul.f32 %v1271, %v1271
        %v1570 = vmul.f32 %v1272, %v1272
        %v1571 = vmul.f32 %v1273, %v1273
        %v1572 = vmul.f32 %v1274, %v1274
        %v1573 = vmul.f32 %v1275, %v1275
        %v1574 = vmul.f32 %v1276, %v1276
        %v1575 = vmul.f32 %v1277, %v1277
        %v1576 = vmul.f32 %v1278, %v1278
        %v1577 = vmul.f32 %v1279, %v1279
        %v1578 = vmul.f32 %v1280, %v1280
        %v1579 = vmul.f32 %v1281, %v1281
        %v1580 = vmul.f32 %v1282, %v1282
        %v1581 = vmul.f32 %v1283, %v1283
        %v1582 = vmul.f32 %v1284, %v1284
        %v1583 = vmul.f32 %v1285, %v1285
        %v1584 = vmul.f32 %v1286, %v1286
        %v1585 = vmul.f32 %v1287, %v1287
        %v1586 = vmul.f32 %v1288, %v1288
        %v1587 = vmul.f32 %v1289, %v1289
        %v1588 = vmul.f32 %v1290, %v1290
        %v1589 = vmul.f32 %v1291, %v1291
        %v1590 = vadd.f32 %v1558, %v1559
        %v1591 = vadd.f32 %v1590, %v1560
        %v1592 = vadd.f32 %v1591, %v1561
        %v1593 = vadd.f32 %v1592, %v1562
        %v1594 = vadd.f32 %v1593, %v1563
        %v1595 = vadd.f32 %v1594, %v1564
        %v1596 = vadd.f32 %v1595, %v1565
        %v1597 = vadd.f32 %v1596, %v1566
        %v1598 = vadd.f32 %v1597, %v1567
        %v1599 = vadd.f32 %v1598, %v1568
        %v1600 = vadd.f32 %v1599, %v1569
        %v1601 = vadd.f32 %v1600, %v1570
        %v1602 = vadd.f32 %v1601, %v1571
        %v1603 = vadd.f32 %v1602, %v1572
        %v1604 = vadd.f32 %v1603, %v1573
        %v1605 = vadd.f32 %v1604, %v1574
        %v1606 = vadd.f32 %v1605, %v1575
        %v1607 = vadd.f32 %v1606, %v1576
        %v1608 = vadd.f32 %v1607, %v1577
        %v1609 = vadd.f32 %v1608, %v1578
        %v1610 = vadd.f32 %v1609, %v1579
        %v1611 = vadd.f32 %v1610, %v1580
        %v1612 = vadd.f32 %v1611, %v1581
        %v1613 = vadd.f32 %v1612, %v1582
        %v1614 = vadd.f32 %v1613, %v1583
        %v1615 = vadd.f32 %v1614, %v1584
        %v1616 = vadd.f32 %v1615, %v1585
        %v1617 = vadd.f32 %v1616, %v1586
        %v1618 = vadd.f32 %v1617, %v1587
        %v1619 = vadd.f32 %v1618, %v1588
        %v1620 = vadd.f32 %v1619, %v1589
        %1621 = vadd.xlane.f32.xlu0 %v1620
        %v1622 = vpop.xlane.xlu0 %1621
        %v1623 = vrot.slane %v1622, 4
        %v1624 = vadd.f32 %v1622, %v1623
        %v1625 = vrot.slane %v1624, 2
        %v1626 = vadd.f32 %v1624, %v1625
        %v1627 = vrot.slane %v1626, 1
        %v1628 = vadd.f32 %v1626, %v1627
        %s1629 = vtos %v1628
        %v1630 = vstv %s1629
        %v1631 = vadd.f32 %v1557, %v1630
        %1632 = vst.msk [vmem:[#allocation4] sm:$0x1] %vm1479, %v1631
        %p1633 = scmp.eq.s32.totalorder %s36, 1
        // Predicated region
        $region69: #{tpu_custom_call.1} parent=47 // pred_check
          %p1634 = pneg %p1633
        $region70: #{tpu_custom_call.1} parent=47 // pred_check_branch
          %1636 = sbr.rel (%p1634) target = $region72
        $region71: #{tpu_custom_call.1} parent=47 // pred_region
          %v1637 = vld [vmem:[#allocation2] sm:$0x1]
          %v1638 = vsub.f32 -60458.805, %v1637
          %v1639 = vld [vmem:[#allocation3] sm:$0x1]
          %v1640 = vmul.f32 %v1639, 0.5
          %v1641 = vsub.f32 %v1638, %v1640
          %1642 = vst.msk [vmem:[%s547] sm:$0x1] %vm1479, %v1641
          %v1643 = vld [vmem:[#allocation4] sm:$0x1]
          %v1644 = vmul.f32 %v1643, -50.0
          %v1645 = vadd.f32 %v1644, 91032.875
          %1646 = vst.msk [vmem:[%s550] sm:$0x1] %vm1479, %v1645
        $region72: #{tpu_custom_call.1} parent=47 // pred_fallthru
          _
        %s1647 = sand.u32 %s234, 1
        %s1648 = scalar_lea.sflag [#allocation7], %s1647
        %s1649 = sand.u32 %s234, 1
        %s1650 = smul.addr %s1649, 16
        %s1651 = scalar_lea.vmem [#allocation13], %s1650
        %p1652 = scmp.lt.s32.totalorder %s35, 1
        %s1653 = scalar_select %p1652, %s35, 1
        %s1654 = scalar_lea.vmem %s8, %s1653
        %p1655 = scmp.lt.s32.totalorder %s35, 1
        %s1656 = scalar_select %p1655, %s35, 1
        %s1657 = scalar_lea.vmem %s9, %s1656
        // Predicated region
        $region73: #{tpu_custom_call.1} parent=47 // pred_check
          %p1658 = pneg %p244
        $region74: #{tpu_custom_call.1} parent=47 // pred_check_branch
          %1660 = sbr.rel (%p1658) target = $region76
        $region75: #{tpu_custom_call.1} parent=47 // pred_region
          %s1661 = smul.u32 2, %s35
          %s1663 = ssub.s32 256, 256
          %1664 = vsyncadd %s1648, %s1663
          %s1665 = smul.addr %s1661, 128
          %s1666 = scalar_lea.hbm %s7, %s1665
          %s1668 = sshll.u32 %s1651, 4
          %s1669 = int_to_ptr.vmem [resolvable:$true] %s1668
          %1671 = dma.vmem_to_hbm [thread:$0]  %s1669, 256, %s1666, %s1648
        $region76: #{tpu_custom_call.1} parent=47 // pred_fallthru
          _
        // Predicated region
        $region77: #{tpu_custom_call.1} parent=47 // pred_check
          %p1672 = pneg %p270
        $region78: #{tpu_custom_call.1} parent=47 // pred_check_branch
          %1674 = sbr.rel (%p1672) target = $region80
        $region79: #{tpu_custom_call.1} parent=47 // pred_region
          _
        $region80: #{tpu_custom_call.1} parent=47 // pred_fallthru
          _
        // Predicated region
        $region81: #{tpu_custom_call.1} parent=47 // pred_check
          %p1675 = pneg %p296
        $region82: #{tpu_custom_call.1} parent=47 // pred_check_branch
          %1677 = sbr.rel (%p1675) target = $region84
        $region83: #{tpu_custom_call.1} parent=47 // pred_region
          _
        $region84: #{tpu_custom_call.1} parent=47 // pred_fallthru
          _
      $region48: #{tpu_custom_call.1} parent=5 // pred_fallthru
        _
      %p1678 = scmp.le.s32.totalorder 2, %s26
      // Predicated region
      $region85: #{tpu_custom_call.1} parent=5 // pred_check
        %p1679 = pneg %p1678
      $region86: #{tpu_custom_call.1} parent=5 // pred_check_branch
        %1681 = sbr.rel (%p1679) target = $region88
      $region87: #{tpu_custom_call.1} parent=5 // pred_region
        %s1682 = ssub.s32 %s26, 2
        // Predicated region
        $region89: #{tpu_custom_call.1} parent=87 // pred_check
          %p1683 = pneg %p250
        $region90: #{tpu_custom_call.1} parent=87 // pred_check_branch
          %1685 = sbr.rel (%p1683) target = $region92
        $region91: #{tpu_custom_call.1} parent=87 // pred_region
          %s1686 = sand.u32 %s235, 1
          %s1687 = scalar_lea.sflag [#allocation7], %s1686
          %s1688 = sand.u32 %s235, 1
          %s1689 = smul.addr %s1688, 16
          %s1690 = scalar_lea.vmem [#allocation13], %s1689
          %1691 = dma.done %s1687, 256
        $region92: #{tpu_custom_call.1} parent=87 // pred_fallthru
          _
        // Predicated region
        $region93: #{tpu_custom_call.1} parent=87 // pred_check
          %p1692 = pneg %p276
        $region94: #{tpu_custom_call.1} parent=87 // pred_check_branch
          %1694 = sbr.rel (%p1692) target = $region96
        $region95: #{tpu_custom_call.1} parent=87 // pred_region
          %p1695 = scmp.lt.s32.totalorder %s37, 1
          %s1696 = scalar_select %p1695, %s37, 1
          %s1697 = scalar_lea.vmem %s8, %s1696
        $region96: #{tpu_custom_call.1} parent=87 // pred_fallthru
          _
        // Predicated region
        $region97: #{tpu_custom_call.1} parent=87 // pred_check
          %p1698 = pneg %p302
        $region98: #{tpu_custom_call.1} parent=87 // pred_check_branch
          %1700 = sbr.rel (%p1698) target = $region100
        $region99: #{tpu_custom_call.1} parent=87 // pred_region
          %p1701 = scmp.lt.s32.totalorder %s37, 1
          %s1702 = scalar_select %p1701, %s37, 1
          %s1703 = scalar_lea.vmem %s9, %s1702
        $region100: #{tpu_custom_call.1} parent=87 // pred_fallthru
          _
      $region88: #{tpu_custom_call.1} parent=5 // pred_fallthru
        _
    $region6: #{tpu_custom_call.1} parent=1 // loop_footer
      %s30 = sadd.s32 1, %s26
    $region7: #{tpu_custom_call.1} parent=1 // loop_footer_branch
      %25 = sbr.rel target = $region3
    $region8: #{tpu_custom_call.1} parent=1 // loop_exit
      _
    %1704 = vsyncpa [#allocation6], 1
    %s1705 = scalar_lea.sflag [#allocation6], 1
    %1706 = vsyncpa %s1705, 1
    %1707 = vsyncpa [#allocation9], 1
    %s1708 = scalar_lea.sflag [#allocation9], 1
    %1709 = vsyncpa %s1708, 1
    %1710 = vsyncpa [#allocation12], 1
    %s1711 = scalar_lea.sflag [#allocation12], 1
    %1712 = vsyncpa %s1711, 1
    %1713 = vsyncpa [#allocation7], 1
    %s1714 = scalar_lea.sflag [#allocation7], 1
    %1715 = vsyncpa %s1714, 1

</llo_original>
